<compile_context>
chip_gen: v7x
topology: tpu7x:2x2x1
jax: 0.10.0
libtpu: 0.0.40
codegen_flags: <defaults>
</compile_context>

<pallas_src>
import functools
import math

import jax
import jax.numpy as jnp
import numpy as np
from jax.experimental import pallas as pl
from jax.experimental.pallas import tpu as pltpu


# Model constants implied by the module (window=50 so the convs line up).
IN_CH = 3        # price features (close/high/low)
M_ASSETS = 11
WINDOW = 50
K1 = 3           # conv1 kernel width
NC1 = 2          # conv1 output channels
WO = WINDOW - K1 + 1          # 48
NC2 = 20         # conv2 / 1x1-conv output channels
HID = 128

# Operand dtype at the MXU boundary (accumulation is always f32).
# bf16 is the native MXU dtype on v6e/v7x and supported on v5e; use jnp.float32
# for bit-exact results (and tighten the test tolerance to 1e-4).
MXU_DTYPE = jnp.bfloat16


def _leaky(v):
    # cmp + mul + select (3 VPU ops), all in f32
    return jnp.where(v >= 0, v, 0.01 * v)


# ----------------------------------------------------------------------------
# Pallas kernel: whole Critic forward on asset-on-sublane tiles
# ----------------------------------------------------------------------------
def critic_kernel(w1_ref,    # SMEM (2, 9)       conv1 weights, [out_ch, ci*3+k]
                  b1_ref,    # SMEM (2,)         conv1 bias
                  price_ref, # VMEM (C, R, W)    R = bb*M rows (batch-major b*M+m)
                  pw_ref,    # VMEM (R, 1)       prev portfolio weight per (b, m) row
                  w2a_ref,   # VMEM (48, 20)     conv(1,48) weights, input channel 0
                  w2b_ref,   # VMEM (48, 20)     conv(1,48) weights, input channel 1
                  b2_ref,    # VMEM (1, 20)
                  w3_ref,    # VMEM (20, 220)    1x1 conv weights lane-tiled to all M slots
                  w3p_ref,   # VMEM (1, 220)     1x1 conv weights for the prev-weight channel
                  b3_ref,    # VMEM (1, 220)
                  mask_ref,  # VMEM (R, 220)     0/1: row r keeps only its own asset's 20 lanes
                  g_ref,     # VMEM (bb, R)      0/1 group-sum: collapses M rows -> 1 per batch
                  w4_ref,    # VMEM (220, 128)   Linear(220->128), rows in m*20+c order
                  b4_ref,    # VMEM (1, 128)
                  w5_ref,    # VMEM (128, 1)     Linear(128->1)
                  b5_ref,    # VMEM (1, 1)
                  out_ref):  # VMEM (bb, 1)      Q value per batch element
    f32 = jnp.float32
    n_in, rows, win = price_ref.shape
    wo = win - K1 + 1                                     # 48

    # ---- conv(1,3): 9 shifted taps x 2 output channels, scalar weights (VPU) ----
    acc0 = jnp.zeros((rows, wo), f32)
    acc1 = jnp.zeros((rows, wo), f32)
    for ci in range(n_in):                                # static 3x3 unroll
        xc = price_ref[ci]                                # (R, W)
        for k in range(K1):
            tap = xc[:, k:k + wo]                         # static lane slice
            t = ci * K1 + k
            acc0 = acc0 + tap * w1_ref[0, t]
            acc1 = acc1 + tap * w1_ref[1, t]
    a0 = _leaky(acc0 + b1_ref[0])                         # (R, 48)
    a1 = _leaky(acc1 + b1_ref[1])                         # (R, 48)

    # ---- conv(1,48): two dense (48,20) matmuls, bf16 operands / f32 accumulate ----
    h2 = _leaky(jnp.dot(a0.astype(MXU_DTYPE), w2a_ref[...], preferred_element_type=f32)
                + jnp.dot(a1.astype(MXU_DTYPE), w2b_ref[...], preferred_element_type=f32)
                + b2_ref[...])                            # (R, 20)

    # ---- 1x1 conv over 21 channels, lane-tiled to all M asset slots ----
    pre3 = (jnp.dot(h2.astype(MXU_DTYPE), w3_ref[...], preferred_element_type=f32)
            + pw_ref[...] * w3p_ref[...] + b3_ref[...])   # (R, 220)
    sel = _leaky(pre3) * mask_ref[...]                    # row keeps only its own slot

    # ---- Flatten (B*M,20) -> (B,220) as an exact 0/1 group-sum matmul (f32) ----
    flat = jnp.dot(g_ref[...], sel, preferred_element_type=f32)   # (bb, 220)

    # ---- Linear(220 -> 128) + Linear(128 -> 1) ----
    h4 = _leaky(jnp.dot(flat.astype(MXU_DTYPE), w4_ref[...], preferred_element_type=f32)
                + b4_ref[...])                            # (bb, 128)
    out_ref[...] = (jnp.dot(h4, w5_ref[...], preferred_element_type=f32)
                    + b5_ref[...])                        # (bb, 1)


# ----------------------------------------------------------------------------
# One-time parameter re-layout (no per-call work; pure layout plumbing)
# ----------------------------------------------------------------------------
def prepare_params(params, m_assets=M_ASSETS, mxu_dtype=MXU_DTYPE):
    W1, b1 = params["W1"], params["b1"]   # (2,3,3), (2,)
    W2, b2 = params["W2"], params["b2"]   # (20,2,48), (20,)
    W3, b3 = params["W3"], params["b3"]   # (20,21), (20,)
    W4, b4 = params["W4"], params["b4"]   # (128, 20*M), (128,)
    W5, b5 = params["W5"], params["b5"]   # (1,128), (1,)
    M = m_assets
    L2 = M * NC2
    p = {}
    p["w1s"] = W1.reshape(NC1, IN_CH * K1).astype(jnp.float32)              # (2, 9) SMEM scalars
    p["b1s"] = b1.astype(jnp.float32)                                        # (2,)
    p["w2a"] = W2[:, 0, :].T.astype(mxu_dtype)                               # (48, 20)
    p["w2b"] = W2[:, 1, :].T.astype(mxu_dtype)                               # (48, 20)
    p["b2"]  = b2.reshape(1, NC2).astype(jnp.float32)
    p["w3"]  = jnp.tile(W3[:, :NC2].T, (1, M)).astype(mxu_dtype)             # (20, 220)
    p["w3p"] = jnp.tile(W3[:, NC2], M).reshape(1, L2).astype(jnp.float32)    # (1, 220)
    p["b3"]  = jnp.tile(b3, M).reshape(1, L2).astype(jnp.float32)            # (1, 220)
    # torch Flatten index is c*M+m; our lane index is m*20+c.
    p["w4"]  = jnp.transpose(W4.reshape(HID, NC2, M), (2, 1, 0)).reshape(L2, HID).astype(mxu_dtype)
    p["b4"]  = b4.reshape(1, HID).astype(jnp.float32)
    p["w5"]  = W5.T.astype(jnp.float32)                                      # (128, 1)
    p["b5"]  = b5.reshape(1, 1).astype(jnp.float32)
    return p


# ----------------------------------------------------------------------------
# Jitted wrapper: input re-layout (constant-folded / fused) + pallas_call
# ----------------------------------------------------------------------------
@functools.partial(jax.jit, static_argnames=("num_batch_blocks",))
def critic_forward(price, prev_weights, current_weights, prepped, num_batch_blocks=1):
    del current_weights   # see TODO(synk) at top of file
    price = price.astype(jnp.float32)
    prev_weights = prev_weights.astype(jnp.float32)
    B, C, M, W = price.shape
    L2 = M * NC2

    nb = num_batch_blocks
    assert B % nb == 0, "num_batch_blocks must divide the batch"
    bb = B // nb            # batches per grid step; for nb > 1 pick bb so bb*M % 8 == 0
    rows = bb * M           # sublane rows per grid step

    # Batch-major rows r = b*M + m
    price_r = jnp.transpose(price, (1, 0, 2, 3)).reshape(C, B * M, W)   # (C, B*M, W)
    pw_col = prev_weights.reshape(B * M, 1)                             # (B*M, 1)

    # Flatten helpers (0/1 constants; identical for every grid step, fold under jit).
    row_asset = jnp.arange(rows, dtype=jnp.int32) % M
    lane_asset = jnp.arange(L2, dtype=jnp.int32) // NC2
    mask = (row_asset[:, None] == lane_asset[None, :]).astype(jnp.float32)        # (rows, 220)
    gsum = (jnp.arange(bb, dtype=jnp.int32)[:, None]
            == (jnp.arange(rows, dtype=jnp.int32)[None, :] // M)).astype(jnp.float32)  # (bb, rows)

    smem = pl.BlockSpec(memory_space=pltpu.MemorySpace.SMEM)
    vmem = pl.BlockSpec(memory_space=pltpu.MemorySpace.VMEM)

    out = pl.pallas_call(
        critic_kernel,
        out_shape=jax.ShapeDtypeStruct((B, 1), jnp.float32),
        grid=(nb,),
        in_specs=[
            smem, smem,                                          # w1s, b1s (scalars)
            pl.BlockSpec((C, rows, W), lambda i: (0, i, 0)),     # price_r  (batch-blocked)
            pl.BlockSpec((rows, 1), lambda i: (i, 0)),           # pw_col   (batch-blocked)
            vmem, vmem, vmem,                                    # w2a, w2b, b2 (resident)
            vmem, vmem, vmem,                                    # w3, w3p, b3  (resident)
            vmem, vmem,                                          # mask, gsum   (resident)
            vmem, vmem, vmem, vmem,                              # w4, b4, w5, b5 (resident)
        ],
        out_specs=pl.BlockSpec((bb, 1), lambda i: (i, 0)),
        compiler_params=pltpu.CompilerParams(dimension_semantics=("parallel",)),
    )(prepped["w1s"], prepped["b1s"], price_r, pw_col,
      prepped["w2a"], prepped["w2b"], prepped["b2"],
      prepped["w3"], prepped["w3p"], prepped["b3"],
      mask, gsum,
      prepped["w4"], prepped["b4"], prepped["w5"], prepped["b5"])
    return out.reshape(-1)


# ----------------------------------------------------------------------------
# Pure-JAX reference (NCHW, mirrors the PyTorch ops) for verification
# ----------------------------------------------------------------------------
def critic_ref(price, prev_weights, params):
    leaky = lambda v: jnp.where(v >= 0, v, 0.01 * v)
    W1, b1 = params["W1"], params["b1"]
    W2, b2 = params["W2"], params["b2"]
    W3, b3 = params["W3"], params["b3"]
    W4, b4 = params["W4"], params["b4"]
    W5, b5 = params["W5"], params["b5"]
    wo = price.shape[-1] - 2

    h1 = b1[None, :, None, None]
    for k in range(3):
        h1 = h1 + jnp.einsum("bcmw,oc->bomw", price[:, :, :, k:k + wo], W1[:, :, k])
    h1 = leaky(h1)                                           # (B, 2, M, 48)
    h2 = jnp.einsum("bcmw,ocw->bom", h1, W2) + b2[None, :, None]
    h2 = leaky(h2)                                           # (B, 20, M)
    xcat = jnp.concatenate([h2, prev_weights[:, None, :]], axis=1)   # (B, 21, M)
    h3 = jnp.einsum("bcm,oc->bom", xcat, W3) + b3[None, :, None]
    h3 = leaky(h3)                                           # (B, 20, M)
    flat = h3.reshape(h3.shape[0], -1)                       # (B, 20*M), channel-major
    h4 = leaky(flat @ W4.T + b4)
    q = h4 @ W5.T + b5
    return q.reshape(-1)


# ----------------------------------------------------------------------------
# Deterministic parameter init (kaiming-style scales; synthetic, no checkpoint)
# ----------------------------------------------------------------------------
def init_params(key, m_assets=11, input_channels=3):
    ks = jax.random.split(key, 10)
    W1 = jax.random.normal(ks[0], (2, input_channels, 3), jnp.float32) * math.sqrt(2.0 / (input_channels * 3))
    b1 = jax.random.normal(ks[1], (2,), jnp.float32) * 0.05
    W2 = jax.random.normal(ks[2], (20, 2, 48), jnp.float32) * math.sqrt(2.0 / (2 * 48))
    b2 = jax.random.normal(ks[3], (20,), jnp.float32) * 0.05
    W3 = jax.random.normal(ks[4], (20, 21), jnp.float32) * math.sqrt(2.0 / 21)
    b3 = jax.random.normal(ks[5], (20,), jnp.float32) * 0.05
    W4 = jax.random.normal(ks[6], (128, 20 * m_assets), jnp.float32) * (1.0 / math.sqrt(20 * m_assets))
    b4 = jax.random.normal(ks[7], (128,), jnp.float32) * 0.05
    W5 = jax.random.normal(ks[8], (1, 128), jnp.float32) * (1.0 / math.sqrt(128))
    b5 = jax.random.normal(ks[9], (1,), jnp.float32) * 0.05
    return dict(W1=W1, b1=b1, W2=W2, b2=b2, W3=W3, b3=b3, W4=W4, b4=b4, W5=W5, b5=b5)


if __name__ == "__main__":
    B, C, M, W = 2, IN_CH, M_ASSETS, WINDOW   # window must be 50 for the convs to line up
    key = jax.random.PRNGKey(0)
    k_price, k_pw, k_cw, k_par = jax.random.split(key, 4)

    price = jax.random.normal(k_price, (B, C, M, W), jnp.float32)
    prev_weights = jax.nn.softmax(jax.random.normal(k_pw, (B, M), jnp.float32), axis=-1)
    current_weights = jax.nn.softmax(jax.random.normal(k_cw, (B, M), jnp.float32), axis=-1)
    params = init_params(k_par, m_assets=M, input_channels=C)

    prepped = prepare_params(params)                       # one-time layout prep
    q = critic_forward(price, prev_weights, current_weights, prepped)
    q = jax.block_until_ready(q)

    q_ref = critic_ref(price, prev_weights, params)
    # Tolerance accounts for bf16 operands at the MXU boundary (f32 accumulate).
    np.testing.assert_allclose(np.asarray(q), np.asarray(q_ref), rtol=2e-2, atol=2e-2)

    print("KERNEL_OK")
</pallas_src>

<mosaic_0001>
module attributes {stable_mosaic.version = 11 : i64} {
  func.func @critic_kernel(%arg0: i32, %arg1: memref<2x9xf32, #tpu.memory_space<smem>>, %arg2: memref<2xf32, #tpu.memory_space<smem>>, %arg3: memref<3x22x50xf32, #tpu.memory_space<vmem>>, %arg4: memref<22x1xf32, #tpu.memory_space<vmem>>, %arg5: memref<48x20xbf16, #tpu.memory_space<vmem>>, %arg6: memref<48x20xbf16, #tpu.memory_space<vmem>>, %arg7: memref<1x20xf32, #tpu.memory_space<vmem>>, %arg8: memref<20x220xbf16, #tpu.memory_space<vmem>>, %arg9: memref<1x220xf32, #tpu.memory_space<vmem>>, %arg10: memref<1x220xf32, #tpu.memory_space<vmem>>, %arg11: memref<22x220xf32, #tpu.memory_space<vmem>>, %arg12: memref<2x22xf32, #tpu.memory_space<vmem>>, %arg13: memref<220x128xbf16, #tpu.memory_space<vmem>>, %arg14: memref<1x128xf32, #tpu.memory_space<vmem>>, %arg15: memref<128x1xf32, #tpu.memory_space<vmem>>, %arg16: memref<1x1xf32, #tpu.memory_space<vmem>>, %arg17: memref<2x1xf32, #tpu.memory_space<vmem>>) attributes {dimension_semantics = [#tpu.dimension_semantics<parallel>], iteration_bounds = array<i64: 1>, scalar_prefetch = 0 : i64, scratch_operands = 0 : i64, tpu.core_type = #tpu.core_type<tc>, window_params = [{transform_indices = @transform_0, window_bounds = array<i64: 2, 9>}, {transform_indices = @transform_1, window_bounds = array<i64: 2>}, {transform_indices = @transform_2, window_bounds = array<i64: 3, 22, 50>}, {transform_indices = @transform_3, window_bounds = array<i64: 22, 1>}, {pipeline_mode = #tpu.pipeline_mode<synchronous>, transform_indices = @transform_4, window_bounds = array<i64: 48, 20>}, {pipeline_mode = #tpu.pipeline_mode<synchronous>, transform_indices = @transform_5, window_bounds = array<i64: 48, 20>}, {pipeline_mode = #tpu.pipeline_mode<synchronous>, transform_indices = @transform_6, window_bounds = array<i64: 1, 20>}, {pipeline_mode = #tpu.pipeline_mode<synchronous>, transform_indices = @transform_7, window_bounds = array<i64: 20, 220>}, {pipeline_mode = #tpu.pipeline_mode<synchronous>, transform_indices = @transform_8, window_bounds = array<i64: 1, 220>}, {pipeline_mode = #tpu.pipeline_mode<synchronous>, transform_indices = @transform_9, window_bounds = array<i64: 1, 220>}, {pipeline_mode = #tpu.pipeline_mode<synchronous>, transform_indices = @transform_10, window_bounds = array<i64: 22, 220>}, {pipeline_mode = #tpu.pipeline_mode<synchronous>, transform_indices = @transform_11, window_bounds = array<i64: 2, 22>}, {pipeline_mode = #tpu.pipeline_mode<synchronous>, transform_indices = @transform_12, window_bounds = array<i64: 220, 128>}, {pipeline_mode = #tpu.pipeline_mode<synchronous>, transform_indices = @transform_13, window_bounds = array<i64: 1, 128>}, {pipeline_mode = #tpu.pipeline_mode<synchronous>, transform_indices = @transform_14, window_bounds = array<i64: 128, 1>}, {pipeline_mode = #tpu.pipeline_mode<synchronous>, transform_indices = @transform_15, window_bounds = array<i64: 1, 1>}, {transform_indices = @transform_16, window_bounds = array<i64: 2, 1>}]} {
    %cst = arith.constant 0.000000e+00 : f32
    %0 = vector.broadcast %cst : f32 to vector<22x48xf32>
    %cst_0 = arith.constant 0.000000e+00 : f32
    %1 = vector.broadcast %cst_0 : f32 to vector<22x48xf32>
    %c0 = arith.constant 0 : index
    %c0_1 = arith.constant 0 : index
    %c0_2 = arith.constant 0 : index
    %2 = vector.load %arg3[%c0, %c0_1, %c0_2] : memref<3x22x50xf32, #tpu.memory_space<vmem>>, vector<1x22x50xf32>
    %3 = vector.shape_cast %2 : vector<1x22x50xf32> to vector<22x50xf32>
    %4 = vector.extract_strided_slice %3 {offsets = [0, 0], sizes = [22, 48], strides = [1, 1]} : vector<22x50xf32> to vector<22x48xf32>
    %c0_3 = arith.constant 0 : index
    %c0_4 = arith.constant 0 : index
    %5 = memref.load %arg1[%c0_3, %c0_4] : memref<2x9xf32, #tpu.memory_space<smem>>
    %6 = vector.broadcast %5 : f32 to vector<22x48xf32>
    %7 = arith.mulf %4, %6 : vector<22x48xf32>
    %8 = arith.addf %0, %7 : vector<22x48xf32>
    %c1 = arith.constant 1 : index
    %c0_5 = arith.constant 0 : index
    %9 = memref.load %arg1[%c1, %c0_5] : memref<2x9xf32, #tpu.memory_space<smem>>
    %10 = vector.broadcast %9 : f32 to vector<22x48xf32>
    %11 = arith.mulf %4, %10 : vector<22x48xf32>
    %12 = arith.addf %1, %11 : vector<22x48xf32>
    %13 = vector.extract_strided_slice %3 {offsets = [0, 1], sizes = [22, 48], strides = [1, 1]} : vector<22x50xf32> to vector<22x48xf32>
    %c0_6 = arith.constant 0 : index
    %c1_7 = arith.constant 1 : index
    %14 = memref.load %arg1[%c0_6, %c1_7] : memref<2x9xf32, #tpu.memory_space<smem>>
    %15 = vector.broadcast %14 : f32 to vector<22x48xf32>
    %16 = arith.mulf %13, %15 : vector<22x48xf32>
    %17 = arith.addf %8, %16 : vector<22x48xf32>
    %c1_8 = arith.constant 1 : index
    %c1_9 = arith.constant 1 : index
    %18 = memref.load %arg1[%c1_8, %c1_9] : memref<2x9xf32, #tpu.memory_space<smem>>
    %19 = vector.broadcast %18 : f32 to vector<22x48xf32>
    %20 = arith.mulf %13, %19 : vector<22x48xf32>
    %21 = arith.addf %12, %20 : vector<22x48xf32>
    %22 = vector.extract_strided_slice %3 {offsets = [0, 2], sizes = [22, 48], strides = [1, 1]} : vector<22x50xf32> to vector<22x48xf32>
    %c0_10 = arith.constant 0 : index
    %c2 = arith.constant 2 : index
    %23 = memref.load %arg1[%c0_10, %c2] : memref<2x9xf32, #tpu.memory_space<smem>>
    %24 = vector.broadcast %23 : f32 to vector<22x48xf32>
    %25 = arith.mulf %22, %24 : vector<22x48xf32>
    %26 = arith.addf %17, %25 : vector<22x48xf32>
    %c1_11 = arith.constant 1 : index
    %c2_12 = arith.constant 2 : index
    %27 = memref.load %arg1[%c1_11, %c2_12] : memref<2x9xf32, #tpu.memory_space<smem>>
    %28 = vector.broadcast %27 : f32 to vector<22x48xf32>
    %29 = arith.mulf %22, %28 : vector<22x48xf32>
    %30 = arith.addf %21, %29 : vector<22x48xf32>
    %c1_13 = arith.constant 1 : index
    %c0_14 = arith.constant 0 : index
    %c0_15 = arith.constant 0 : index
    %31 = vector.load %arg3[%c1_13, %c0_14, %c0_15] : memref<3x22x50xf32, #tpu.memory_space<vmem>>, vector<1x22x50xf32>
    %32 = vector.shape_cast %31 : vector<1x22x50xf32> to vector<22x50xf32>
    %33 = vector.extract_strided_slice %32 {offsets = [0, 0], sizes = [22, 48], strides = [1, 1]} : vector<22x50xf32> to vector<22x48xf32>
    %c0_16 = arith.constant 0 : index
    %c3 = arith.constant 3 : index
    %34 = memref.load %arg1[%c0_16, %c3] : memref<2x9xf32, #tpu.memory_space<smem>>
    %35 = vector.broadcast %34 : f32 to vector<22x48xf32>
    %36 = arith.mulf %33, %35 : vector<22x48xf32>
    %37 = arith.addf %26, %36 : vector<22x48xf32>
    %c1_17 = arith.constant 1 : index
    %c3_18 = arith.constant 3 : index
    %38 = memref.load %arg1[%c1_17, %c3_18] : memref<2x9xf32, #tpu.memory_space<smem>>
    %39 = vector.broadcast %38 : f32 to vector<22x48xf32>
    %40 = arith.mulf %33, %39 : vector<22x48xf32>
    %41 = arith.addf %30, %40 : vector<22x48xf32>
    %42 = vector.extract_strided_slice %32 {offsets = [0, 1], sizes = [22, 48], strides = [1, 1]} : vector<22x50xf32> to vector<22x48xf32>
    %c0_19 = arith.constant 0 : index
    %c4 = arith.constant 4 : index
    %43 = memref.load %arg1[%c0_19, %c4] : memref<2x9xf32, #tpu.memory_space<smem>>
    %44 = vector.broadcast %43 : f32 to vector<22x48xf32>
    %45 = arith.mulf %42, %44 : vector<22x48xf32>
    %46 = arith.addf %37, %45 : vector<22x48xf32>
    %c1_20 = arith.constant 1 : index
    %c4_21 = arith.constant 4 : index
    %47 = memref.load %arg1[%c1_20, %c4_21] : memref<2x9xf32, #tpu.memory_space<smem>>
    %48 = vector.broadcast %47 : f32 to vector<22x48xf32>
    %49 = arith.mulf %42, %48 : vector<22x48xf32>
    %50 = arith.addf %41, %49 : vector<22x48xf32>
    %51 = vector.extract_strided_slice %32 {offsets = [0, 2], sizes = [22, 48], strides = [1, 1]} : vector<22x50xf32> to vector<22x48xf32>
    %c0_22 = arith.constant 0 : index
    %c5 = arith.constant 5 : index
    %52 = memref.load %arg1[%c0_22, %c5] : memref<2x9xf32, #tpu.memory_space<smem>>
    %53 = vector.broadcast %52 : f32 to vector<22x48xf32>
    %54 = arith.mulf %51, %53 : vector<22x48xf32>
    %55 = arith.addf %46, %54 : vector<22x48xf32>
    %c1_23 = arith.constant 1 : index
    %c5_24 = arith.constant 5 : index
    %56 = memref.load %arg1[%c1_23, %c5_24] : memref<2x9xf32, #tpu.memory_space<smem>>
    %57 = vector.broadcast %56 : f32 to vector<22x48xf32>
    %58 = arith.mulf %51, %57 : vector<22x48xf32>
    %59 = arith.addf %50, %58 : vector<22x48xf32>
    %c2_25 = arith.constant 2 : index
    %c0_26 = arith.constant 0 : index
    %c0_27 = arith.constant 0 : index
    %60 = vector.load %arg3[%c2_25, %c0_26, %c0_27] : memref<3x22x50xf32, #tpu.memory_space<vmem>>, vector<1x22x50xf32>
    %61 = vector.shape_cast %60 : vector<1x22x50xf32> to vector<22x50xf32>
    %62 = vector.extract_strided_slice %61 {offsets = [0, 0], sizes = [22, 48], strides = [1, 1]} : vector<22x50xf32> to vector<22x48xf32>
    %c0_28 = arith.constant 0 : index
    %c6 = arith.constant 6 : index
    %63 = memref.load %arg1[%c0_28, %c6] : memref<2x9xf32, #tpu.memory_space<smem>>
    %64 = vector.broadcast %63 : f32 to vector<22x48xf32>
    %65 = arith.mulf %62, %64 : vector<22x48xf32>
    %66 = arith.addf %55, %65 : vector<22x48xf32>
    %c1_29 = arith.constant 1 : index
    %c6_30 = arith.constant 6 : index
    %67 = memref.load %arg1[%c1_29, %c6_30] : memref<2x9xf32, #tpu.memory_space<smem>>
    %68 = vector.broadcast %67 : f32 to vector<22x48xf32>
    %69 = arith.mulf %62, %68 : vector<22x48xf32>
    %70 = arith.addf %59, %69 : vector<22x48xf32>
    %71 = vector.extract_strided_slice %61 {offsets = [0, 1], sizes = [22, 48], strides = [1, 1]} : vector<22x50xf32> to vector<22x48xf32>
    %c0_31 = arith.constant 0 : index
    %c7 = arith.constant 7 : index
    %72 = memref.load %arg1[%c0_31, %c7] : memref<2x9xf32, #tpu.memory_space<smem>>
    %73 = vector.broadcast %72 : f32 to vector<22x48xf32>
    %74 = arith.mulf %71, %73 : vector<22x48xf32>
    %75 = arith.addf %66, %74 : vector<22x48xf32>
    %c1_32 = arith.constant 1 : index
    %c7_33 = arith.constant 7 : index
    %76 = memref.load %arg1[%c1_32, %c7_33] : memref<2x9xf32, #tpu.memory_space<smem>>
    %77 = vector.broadcast %76 : f32 to vector<22x48xf32>
    %78 = arith.mulf %71, %77 : vector<22x48xf32>
    %79 = arith.addf %70, %78 : vector<22x48xf32>
    %80 = vector.extract_strided_slice %61 {offsets = [0, 2], sizes = [22, 48], strides = [1, 1]} : vector<22x50xf32> to vector<22x48xf32>
    %c0_34 = arith.constant 0 : index
    %c8 = arith.constant 8 : index
    %81 = memref.load %arg1[%c0_34, %c8] : memref<2x9xf32, #tpu.memory_space<smem>>
    %82 = vector.broadcast %81 : f32 to vector<22x48xf32>
    %83 = arith.mulf %80, %82 : vector<22x48xf32>
    %84 = arith.addf %75, %83 : vector<22x48xf32>
    %c1_35 = arith.constant 1 : index
    %c8_36 = arith.constant 8 : index
    %85 = memref.load %arg1[%c1_35, %c8_36] : memref<2x9xf32, #tpu.memory_space<smem>>
    %86 = vector.broadcast %85 : f32 to vector<22x48xf32>
    %87 = arith.mulf %80, %86 : vector<22x48xf32>
    %88 = arith.addf %79, %87 : vector<22x48xf32>
    %c0_37 = arith.constant 0 : index
    %89 = memref.load %arg2[%c0_37] : memref<2xf32, #tpu.memory_space<smem>>
    %90 = vector.broadcast %89 : f32 to vector<22x48xf32>
    %91 = arith.addf %84, %90 : vector<22x48xf32>
    %cst_38 = arith.constant 0.000000e+00 : f32
    %92 = vector.broadcast %cst_38 : f32 to vector<22x48xf32>
    %93 = arith.cmpf oge, %91, %92 : vector<22x48xf32>
    %cst_39 = arith.constant 0.00999999977 : f32
    %94 = vector.broadcast %cst_39 : f32 to vector<22x48xf32>
    %95 = arith.mulf %94, %91 : vector<22x48xf32>
    %96 = arith.select %93, %91, %95 : vector<22x48xi1>, vector<22x48xf32>
    %c1_40 = arith.constant 1 : index
    %97 = memref.load %arg2[%c1_40] : memref<2xf32, #tpu.memory_space<smem>>
    %98 = vector.broadcast %97 : f32 to vector<22x48xf32>
    %99 = arith.addf %88, %98 : vector<22x48xf32>
    %cst_41 = arith.constant 0.000000e+00 : f32
    %100 = vector.broadcast %cst_41 : f32 to vector<22x48xf32>
    %101 = arith.cmpf oge, %99, %100 : vector<22x48xf32>
    %cst_42 = arith.constant 0.00999999977 : f32
    %102 = vector.broadcast %cst_42 : f32 to vector<22x48xf32>
    %103 = arith.mulf %102, %99 : vector<22x48xf32>
    %104 = arith.select %101, %99, %103 : vector<22x48xi1>, vector<22x48xf32>
    %105 = arith.truncf %96 : vector<22x48xf32> to vector<22x48xbf16>
    %c0_43 = arith.constant 0 : index
    %c0_44 = arith.constant 0 : index
    %106 = vector.load %arg5[%c0_43, %c0_44] : memref<48x20xbf16, #tpu.memory_space<vmem>>, vector<48x20xbf16>
    %cst_45 = arith.constant dense<0.000000e+00> : vector<22x20xf32>
    %107 = tpu.matmul %105, %106, %cst_45 {dimension_numbers = #tpu.dot_dimension_numbers<[1], [0], [0], [1], [0, 0, 1, 1], [], []>} : vector<22x48xbf16>, vector<48x20xbf16>, vector<22x20xf32> -> vector<22x20xf32>
    %108 = arith.truncf %104 : vector<22x48xf32> to vector<22x48xbf16>
    %c0_46 = arith.constant 0 : index
    %c0_47 = arith.constant 0 : index
    %109 = vector.load %arg6[%c0_46, %c0_47] : memref<48x20xbf16, #tpu.memory_space<vmem>>, vector<48x20xbf16>
    %cst_48 = arith.constant dense<0.000000e+00> : vector<22x20xf32>
    %110 = tpu.matmul %108, %109, %cst_48 {dimension_numbers = #tpu.dot_dimension_numbers<[1], [0], [0], [1], [0, 0, 1, 1], [], []>} : vector<22x48xbf16>, vector<48x20xbf16>, vector<22x20xf32> -> vector<22x20xf32>
    %111 = arith.addf %107, %110 : vector<22x20xf32>
    %c0_49 = arith.constant 0 : index
    %c0_50 = arith.constant 0 : index
    %112 = vector.load %arg7[%c0_49, %c0_50] : memref<1x20xf32, #tpu.memory_space<vmem>>, vector<1x20xf32>
    %113 = vector.broadcast %112 : vector<1x20xf32> to vector<22x20xf32>
    %114 = arith.addf %111, %113 : vector<22x20xf32>
    %cst_51 = arith.constant 0.000000e+00 : f32
    %115 = vector.broadcast %cst_51 : f32 to vector<22x20xf32>
    %116 = arith.cmpf oge, %114, %115 : vector<22x20xf32>
    %cst_52 = arith.constant 0.00999999977 : f32
    %117 = vector.broadcast %cst_52 : f32 to vector<22x20xf32>
    %118 = arith.mulf %117, %114 : vector<22x20xf32>
    %119 = arith.select %116, %114, %118 : vector<22x20xi1>, vector<22x20xf32>
    %120 = arith.truncf %119 : vector<22x20xf32> to vector<22x20xbf16>
    %c0_53 = arith.constant 0 : index
    %c0_54 = arith.constant 0 : index
    %121 = vector.load %arg8[%c0_53, %c0_54] : memref<20x220xbf16, #tpu.memory_space<vmem>>, vector<20x220xbf16>
    %cst_55 = arith.constant dense<0.000000e+00> : vector<22x220xf32>
    %122 = tpu.matmul %120, %121, %cst_55 {dimension_numbers = #tpu.dot_dimension_numbers<[1], [0], [0], [1], [0, 0, 1, 1], [], []>} : vector<22x20xbf16>, vector<20x220xbf16>, vector<22x220xf32> -> vector<22x220xf32>
    %c0_56 = arith.constant 0 : index
    %c0_57 = arith.constant 0 : index
    %123 = vector.load %arg4[%c0_56, %c0_57] : memref<22x1xf32, #tpu.memory_space<vmem>>, vector<22x1xf32>
    %c0_58 = arith.constant 0 : index
    %c0_59 = arith.constant 0 : index
    %124 = vector.load %arg9[%c0_58, %c0_59] : memref<1x220xf32, #tpu.memory_space<vmem>>, vector<1x220xf32>
    %125 = vector.broadcast %123 : vector<22x1xf32> to vector<22x220xf32>
    %126 = vector.broadcast %124 : vector<1x220xf32> to vector<22x220xf32>
    %127 = arith.mulf %125, %126 : vector<22x220xf32>
    %128 = arith.addf %122, %127 : vector<22x220xf32>
    %c0_60 = arith.constant 0 : index
    %c0_61 = arith.constant 0 : index
    %129 = vector.load %arg10[%c0_60, %c0_61] : memref<1x220xf32, #tpu.memory_space<vmem>>, vector<1x220xf32>
    %130 = vector.broadcast %129 : vector<1x220xf32> to vector<22x220xf32>
    %131 = arith.addf %128, %130 : vector<22x220xf32>
    %cst_62 = arith.constant 0.000000e+00 : f32
    %132 = vector.broadcast %cst_62 : f32 to vector<22x220xf32>
    %133 = arith.cmpf oge, %131, %132 : vector<22x220xf32>
    %cst_63 = arith.constant 0.00999999977 : f32
    %134 = vector.broadcast %cst_63 : f32 to vector<22x220xf32>
    %135 = arith.mulf %134, %131 : vector<22x220xf32>
    %136 = arith.select %133, %131, %135 : vector<22x220xi1>, vector<22x220xf32>
    %c0_64 = arith.constant 0 : index
    %c0_65 = arith.constant 0 : index
    %137 = vector.load %arg11[%c0_64, %c0_65] : memref<22x220xf32, #tpu.memory_space<vmem>>, vector<22x220xf32>
    %138 = arith.mulf %136, %137 : vector<22x220xf32>
    %c0_66 = arith.constant 0 : index
    %c0_67 = arith.constant 0 : index
    %139 = vector.load %arg12[%c0_66, %c0_67] : memref<2x22xf32, #tpu.memory_space<vmem>>, vector<2x22xf32>
    %cst_68 = arith.constant dense<0.000000e+00> : vector<2x220xf32>
    %140 = tpu.matmul %139, %138, %cst_68 {dimension_numbers = #tpu.dot_dimension_numbers<[1], [0], [0], [1], [0, 0, 1, 1], [], []>} : vector<2x22xf32>, vector<22x220xf32>, vector<2x220xf32> -> vector<2x220xf32>
    %141 = arith.truncf %140 : vector<2x220xf32> to vector<2x220xbf16>
    %c0_69 = arith.constant 0 : index
    %c0_70 = arith.constant 0 : index
    %142 = vector.load %arg13[%c0_69, %c0_70] : memref<220x128xbf16, #tpu.memory_space<vmem>>, vector<220x128xbf16>
    %cst_71 = arith.constant dense<0.000000e+00> : vector<2x128xf32>
    %143 = tpu.matmul %141, %142, %cst_71 {dimension_numbers = #tpu.dot_dimension_numbers<[1], [0], [0], [1], [0, 0, 1, 1], [], []>} : vector<2x220xbf16>, vector<220x128xbf16>, vector<2x128xf32> -> vector<2x128xf32>
    %c0_72 = arith.constant 0 : index
    %c0_73 = arith.constant 0 : index
    %144 = vector.load %arg14[%c0_72, %c0_73] : memref<1x128xf32, #tpu.memory_space<vmem>>, vector<1x128xf32>
    %145 = vector.broadcast %144 : vector<1x128xf32> to vector<2x128xf32>
    %146 = arith.addf %143, %145 : vector<2x128xf32>
    %cst_74 = arith.constant 0.000000e+00 : f32
    %147 = vector.broadcast %cst_74 : f32 to vector<2x128xf32>
    %148 = arith.cmpf oge, %146, %147 : vector<2x128xf32>
    %cst_75 = arith.constant 0.00999999977 : f32
    %149 = vector.broadcast %cst_75 : f32 to vector<2x128xf32>
    %150 = arith.mulf %149, %146 : vector<2x128xf32>
    %151 = arith.select %148, %146, %150 : vector<2x128xi1>, vector<2x128xf32>
    %c0_76 = arith.constant 0 : index
    %c0_77 = arith.constant 0 : index
    %152 = vector.load %arg15[%c0_76, %c0_77] : memref<128x1xf32, #tpu.memory_space<vmem>>, vector<128x1xf32>
    %cst_78 = arith.constant dense<0.000000e+00> : vector<2x1xf32>
    %153 = tpu.matmul %151, %152, %cst_78 {dimension_numbers = #tpu.dot_dimension_numbers<[1], [0], [0], [1], [0, 0, 1, 1], [], []>} : vector<2x128xf32>, vector<128x1xf32>, vector<2x1xf32> -> vector<2x1xf32>
    %c0_79 = arith.constant 0 : index
    %c0_80 = arith.constant 0 : index
    %154 = vector.load %arg16[%c0_79, %c0_80] : memref<1x1xf32, #tpu.memory_space<vmem>>, vector<1x1xf32>
    %155 = vector.broadcast %154 : vector<1x1xf32> to vector<2x1xf32>
    %156 = arith.addf %153, %155 : vector<2x1xf32>
    %c0_81 = arith.constant 0 : index
    %c0_82 = arith.constant 0 : index
    %157 = vector.load %arg17[%c0_81, %c0_82] : memref<2x1xf32, #tpu.memory_space<vmem>>, vector<2x1xf32>
    tpu.vector_store %arg17[%c0_81, %c0_82], %156 {strides = array<i32>} : memref<2x1xf32, #tpu.memory_space<vmem>>, vector<2x1xf32>,
    return
  }
  func.func @transform_0(%arg0: i32) -> (i32, i32) {
    %c0_i32 = arith.constant 0 : i32
    %c0_i32_0 = arith.constant 0 : i32
    %c0_i32_1 = arith.constant 0 : i32
    return %c0_i32, %c0_i32_0 : i32, i32
  }
  func.func @transform_1(%arg0: i32) -> i32 {
    %c0_i32 = arith.constant 0 : i32
    %c0_i32_0 = arith.constant 0 : i32
    return %c0_i32 : i32
  }
  func.func @transform_2(%arg0: i32) -> (i32, i32, i32) {
    %c0_i32 = arith.constant 0 : i32
    %c0_i32_0 = arith.constant 0 : i32
    %c0_i32_1 = arith.constant 0 : i32
    return %c0_i32, %arg0, %c0_i32_0 : i32, i32, i32
  }
  func.func @transform_3(%arg0: i32) -> (i32, i32) {
    %c0_i32 = arith.constant 0 : i32
    %c0_i32_0 = arith.constant 0 : i32
    return %arg0, %c0_i32 : i32, i32
  }
  func.func @transform_4(%arg0: i32) -> (i32, i32) {
    %c0_i32 = arith.constant 0 : i32
    %c0_i32_0 = arith.constant 0 : i32
    %c0_i32_1 = arith.constant 0 : i32
    return %c0_i32, %c0_i32_0 : i32, i32
  }
  func.func @transform_5(%arg0: i32) -> (i32, i32) {
    %c0_i32 = arith.constant 0 : i32
    %c0_i32_0 = arith.constant 0 : i32
    %c0_i32_1 = arith.constant 0 : i32
    return %c0_i32, %c0_i32_0 : i32, i32
  }
  func.func @transform_6(%arg0: i32) -> (i32, i32) {
    %c0_i32 = arith.constant 0 : i32
    %c0_i32_0 = arith.constant 0 : i32
    %c0_i32_1 = arith.constant 0 : i32
    return %c0_i32, %c0_i32_0 : i32, i32
  }
  func.func @transform_7(%arg0: i32) -> (i32, i32) {
    %c0_i32 = arith.constant 0 : i32
    %c0_i32_0 = arith.constant 0 : i32
    %c0_i32_1 = arith.constant 0 : i32
    return %c0_i32, %c0_i32_0 : i32, i32
  }
  func.func @transform_8(%arg0: i32) -> (i32, i32) {
    %c0_i32 = arith.constant 0 : i32
    %c0_i32_0 = arith.constant 0 : i32
    %c0_i32_1 = arith.constant 0 : i32
    return %c0_i32, %c0_i32_0 : i32, i32
  }
  func.func @transform_9(%arg0: i32) -> (i32, i32) {
    %c0_i32 = arith.constant 0 : i32
    %c0_i32_0 = arith.constant 0 : i32
    %c0_i32_1 = arith.constant 0 : i32
    return %c0_i32, %c0_i32_0 : i32, i32
  }
  func.func @transform_10(%arg0: i32) -> (i32, i32) {
    %c0_i32 = arith.constant 0 : i32
    %c0_i32_0 = arith.constant 0 : i32
    %c0_i32_1 = arith.constant 0 : i32
    return %c0_i32, %c0_i32_0 : i32, i32
  }
  func.func @transform_11(%arg0: i32) -> (i32, i32) {
    %c0_i32 = arith.constant 0 : i32
    %c0_i32_0 = arith.constant 0 : i32
    %c0_i32_1 = arith.constant 0 : i32
    return %c0_i32, %c0_i32_0 : i32, i32
  }
  func.func @transform_12(%arg0: i32) -> (i32, i32) {
    %c0_i32 = arith.constant 0 : i32
    %c0_i32_0 = arith.constant 0 : i32
    %c0_i32_1 = arith.constant 0 : i32
    return %c0_i32, %c0_i32_0 : i32, i32
  }
  func.func @transform_13(%arg0: i32) -> (i32, i32) {
    %c0_i32 = arith.constant 0 : i32
    %c0_i32_0 = arith.constant 0 : i32
    %c0_i32_1 = arith.constant 0 : i32
    return %c0_i32, %c0_i32_0 : i32, i32
  }
  func.func @transform_14(%arg0: i32) -> (i32, i32) {
    %c0_i32 = arith.constant 0 : i32
    %c0_i32_0 = arith.constant 0 : i32
    %c0_i32_1 = arith.constant 0 : i32
    return %c0_i32, %c0_i32_0 : i32, i32
  }
  func.func @transform_15(%arg0: i32) -> (i32, i32) {
    %c0_i32 = arith.constant 0 : i32
    %c0_i32_0 = arith.constant 0 : i32
    %c0_i32_1 = arith.constant 0 : i32
    return %c0_i32, %c0_i32_0 : i32, i32
  }
  func.func @transform_16(%arg0: i32) -> (i32, i32) {
    %c0_i32 = arith.constant 0 : i32
    %c0_i32_0 = arith.constant 0 : i32
    return %arg0, %c0_i32 : i32, i32
  }
}

</mosaic_0001>

<llo_original>
// kernel: critic_forward.1
$region0: #{critic_forward.1}
  #allocation0 [shape = 'u32[]', space=smem, size = 0x4, offset = 0x4, fixed_abs, tag = 'smem constant byte address 0x4 - core index']
  #allocation1 [shape = 'u32[144,128]{1,0:T(1,128)}', space=vmem, size = 0x12000, scoped, tag = 'internal scratch']
  #allocation2 [shape = 'f32[1,1]{1,0:T(1,128)S(1)}', space=vmem, size = 0x200, scoped, tag = 'scoped memory for critic_forward.1']
  %s0 = inlined_call_operand.vmem [shape: f32[2,9], index: 0, kind: input, shape index: {}]
  %s1 = inlined_call_operand.vmem [shape: f32[2], index: 1, kind: input, shape index: {}]
  %s2 = inlined_call_operand.vmem [shape: f32[3,22,50], index: 2, kind: input, shape index: {}]
  %s3 = inlined_call_operand.vmem [shape: f32[22,1], index: 3, kind: input, shape index: {}]
  %s4 = inlined_call_operand.vmem [shape: bf16[48,20], index: 4, kind: input, shape index: {}]
  %s5 = inlined_call_operand.vmem [shape: bf16[48,20], index: 5, kind: input, shape index: {}]
  %s6 = inlined_call_operand.vmem [shape: f32[1,20], index: 6, kind: input, shape index: {}]
  %s7 = inlined_call_operand.vmem [shape: bf16[20,220], index: 7, kind: input, shape index: {}]
  %s8 = inlined_call_operand.vmem [shape: f32[1,220], index: 8, kind: input, shape index: {}]
  %s9 = inlined_call_operand.vmem [shape: f32[1,220], index: 9, kind: input, shape index: {}]
  %s10 = inlined_call_operand.vmem [shape: f32[22,220], index: 10, kind: input, shape index: {}]
  %s11 = inlined_call_operand.vmem [shape: f32[2,22], index: 11, kind: input, shape index: {}]
  %s12 = inlined_call_operand.vmem [shape: bf16[220,128], index: 12, kind: input, shape index: {}]
  %s13 = inlined_call_operand.vmem [shape: f32[1,128], index: 13, kind: input, shape index: {}]
  %s14 = inlined_call_operand.vmem [shape: f32[128,1], index: 14, kind: input, shape index: {}]
  %s15 = inlined_call_operand.<no memory space> [shape: f32[1,1], index: 15, kind: input, shape index: {}]
  %s16 = inlined_call_operand.vmem [shape: f32[2,1], index: 16, kind: output, shape index: {}]
  %s17 = sld [smem:[#allocation0]]
  $region82: #{critic_forward.1} parent=0
    _
  %s19 = ssub.s32 1, %s17
  %s20 = scalar_select 0, %s19, %s17
  %v21 = vstv %s15
  %22 = vst [vmem:[#allocation2] sm:$0x1] %v21
  $region1: #{critic_forward.1} parent=0
    #allocation3 [shape = 'u8[1024]{0}', space=smem, size = 0x400, scoped, tag = 'input window, operand 0, single buffered']
    #allocation4 [shape = 's32[1]{0}', space=sflag, size = 0x4, scoped, tag = 'scoped memory for critic_forward.1']
    #allocation5 [shape = 'u8[512]{0}', space=smem, size = 0x200, scoped, tag = 'input window, operand 1, single buffered']
    #allocation6 [shape = 's32[1]{0}', space=sflag, size = 0x4, scoped, tag = 'scoped memory for critic_forward.1']
    %23 = vsyncpa [#allocation4], 0
    %24 = vsyncpa [#allocation6], 0
    // Predicated region
    $region2: #{critic_forward.1} parent=1 // pred_check
      _
    $region3: #{critic_forward.1} parent=1 // pred_check_branch
      %26 = sbr.rel (0) target = $region5
    $region4: #{critic_forward.1} parent=1 // pred_region
      %s28 = ssub.s32 32, 32
      %29 = vsyncadd [#allocation4], %s28
      %s31 = sshll.u32 %s0, 4
      %s32 = int_to_ptr.vmem [resolvable:$true] %s31
      %34 = dma.vmem_to_smem %s32, 32, [#allocation3], [#allocation4]
    $region5: #{critic_forward.1} parent=1 // pred_fallthru
      _
    // Predicated region
    $region6: #{critic_forward.1} parent=1 // pred_check
      _
    $region7: #{critic_forward.1} parent=1 // pred_check_branch
      %36 = sbr.rel (0) target = $region9
    $region8: #{critic_forward.1} parent=1 // pred_region
      %s38 = ssub.s32 16, 16
      %39 = vsyncadd [#allocation6], %s38
      %s41 = sshll.u32 %s1, 4
      %s42 = int_to_ptr.vmem [resolvable:$true] %s41
      %44 = dma.vmem_to_smem %s42, 16, [#allocation5], [#allocation6]
    $region9: #{critic_forward.1} parent=1 // pred_fallthru
      _
    // Predicated region
    $region10: #{critic_forward.1} parent=1 // pred_check
      _
    $region11: #{critic_forward.1} parent=1 // pred_check_branch
      %46 = sbr.rel (0) target = $region13
    $region12: #{critic_forward.1} parent=1 // pred_region
      _
    $region13: #{critic_forward.1} parent=1 // pred_fallthru
      _
    // Predicated region
    $region14: #{critic_forward.1} parent=1 // pred_check
      _
    $region15: #{critic_forward.1} parent=1 // pred_check_branch
      %48 = sbr.rel (0) target = $region17
    $region16: #{critic_forward.1} parent=1 // pred_region
      _
    $region17: #{critic_forward.1} parent=1 // pred_fallthru
      _
    // Predicated region
    $region18: #{critic_forward.1} parent=1 // pred_check
      _
    $region19: #{critic_forward.1} parent=1 // pred_check_branch
      %50 = sbr.rel (0) target = $region21
    $region20: #{critic_forward.1} parent=1 // pred_region
      _
    $region21: #{critic_forward.1} parent=1 // pred_fallthru
      _
    // Predicated region
    $region22: #{critic_forward.1} parent=1 // pred_check
      _
    $region23: #{critic_forward.1} parent=1 // pred_check_branch
      %52 = sbr.rel (0) target = $region25
    $region24: #{critic_forward.1} parent=1 // pred_region
      _
    $region25: #{critic_forward.1} parent=1 // pred_fallthru
      _
    // Predicated region
    $region26: #{critic_forward.1} parent=1 // pred_check
      _
    $region27: #{critic_forward.1} parent=1 // pred_check_branch
      %54 = sbr.rel (0) target = $region29
    $region28: #{critic_forward.1} parent=1 // pred_region
      _
    $region29: #{critic_forward.1} parent=1 // pred_fallthru
      _
    // Predicated region
    $region30: #{critic_forward.1} parent=1 // pred_check
      _
    $region31: #{critic_forward.1} parent=1 // pred_check_branch
      %56 = sbr.rel (0) target = $region33
    $region32: #{critic_forward.1} parent=1 // pred_region
      _
    $region33: #{critic_forward.1} parent=1 // pred_fallthru
      _
    // Predicated region
    $region34: #{critic_forward.1} parent=1 // pred_check
      _
    $region35: #{critic_forward.1} parent=1 // pred_check_branch
      %58 = sbr.rel (0) target = $region37
    $region36: #{critic_forward.1} parent=1 // pred_region
      _
    $region37: #{critic_forward.1} parent=1 // pred_fallthru
      _
    // Predicated region
    $region38: #{critic_forward.1} parent=1 // pred_check
      _
    $region39: #{critic_forward.1} parent=1 // pred_check_branch
      %60 = sbr.rel (0) target = $region41
    $region40: #{critic_forward.1} parent=1 // pred_region
      _
    $region41: #{critic_forward.1} parent=1 // pred_fallthru
      _
    // Predicated region
    $region42: #{critic_forward.1} parent=1 // pred_check
      _
    $region43: #{critic_forward.1} parent=1 // pred_check_branch
      %62 = sbr.rel (0) target = $region45
    $region44: #{critic_forward.1} parent=1 // pred_region
      _
    $region45: #{critic_forward.1} parent=1 // pred_fallthru
      _
    // Predicated region
    $region46: #{critic_forward.1} parent=1 // pred_check
      _
    $region47: #{critic_forward.1} parent=1 // pred_check_branch
      %64 = sbr.rel (0) target = $region49
    $region48: #{critic_forward.1} parent=1 // pred_region
      _
    $region49: #{critic_forward.1} parent=1 // pred_fallthru
      _
    // Predicated region
    $region50: #{critic_forward.1} parent=1 // pred_check
      _
    $region51: #{critic_forward.1} parent=1 // pred_check_branch
      %66 = sbr.rel (0) target = $region53
    $region52: #{critic_forward.1} parent=1 // pred_region
      _
    $region53: #{critic_forward.1} parent=1 // pred_fallthru
      _
    // Predicated region
    $region54: #{critic_forward.1} parent=1 // pred_check
      _
    $region55: #{critic_forward.1} parent=1 // pred_check_branch
      %68 = sbr.rel (0) target = $region57
    $region56: #{critic_forward.1} parent=1 // pred_region
      _
    $region57: #{critic_forward.1} parent=1 // pred_fallthru
      _
    // Predicated region
    $region58: #{critic_forward.1} parent=1 // pred_check
      _
    $region59: #{critic_forward.1} parent=1 // pred_check_branch
      %70 = sbr.rel (0) target = $region61
    $region60: #{critic_forward.1} parent=1 // pred_region
      _
    $region61: #{critic_forward.1} parent=1 // pred_fallthru
      _
    // Predicated region
    $region62: #{critic_forward.1} parent=1 // pred_check
      _
    $region63: #{critic_forward.1} parent=1 // pred_check_branch
      %72 = sbr.rel (0) target = $region65
    $region64: #{critic_forward.1} parent=1 // pred_region
      _
    $region65: #{critic_forward.1} parent=1 // pred_fallthru
      _
    // Predicated region
    $region66: #{critic_forward.1} parent=1 // pred_check
      _
    $region67: #{critic_forward.1} parent=1 // pred_check_branch
      %74 = sbr.rel (0) target = $region69
    $region68: #{critic_forward.1} parent=1 // pred_region
      %75 = dma.done [#allocation4], 32
    $region69: #{critic_forward.1} parent=1 // pred_fallthru
      _
    // Predicated region
    $region70: #{critic_forward.1} parent=1 // pred_check
      _
    $region71: #{critic_forward.1} parent=1 // pred_check_branch
      %77 = sbr.rel (0) target = $region73
    $region72: #{critic_forward.1} parent=1 // pred_region
      %78 = dma.done [#allocation6], 16
    $region73: #{critic_forward.1} parent=1 // pred_fallthru
      _
    %79 = sfence
    %v81 = vld [vmem:[%s2] sm:$0xff]
    %v82 = vld [vmem:[%s2 + $0x8] sm:$0xff]
    %v83 = vld [vmem:[%s2 + $0x10] sm:$0x3f]
    %s84 = sld [smem:[#allocation3]]
    %v85 = vstv %s84
    %v86 = vmul.f32 %v81, %v85
    %v87 = vmul.f32 %v82, %v85
    %v88 = vmul.f32 %v83, %v85
    %v89 = vadd.f32 %v86, 0.0
    %v90 = vadd.f32 %v87, 0.0
    %v91 = vadd.f32 %v88, 0.0
    %s92 = sld [smem:[#allocation3 + $0x80]]
    %v93 = vstv %s92
    %v94 = vmul.f32 %v81, %v93
    %v95 = vmul.f32 %v82, %v93
    %v96 = vmul.f32 %v83, %v93
    %v97 = vadd.f32 %v94, 0.0
    %v98 = vadd.f32 %v95, 0.0
    %v99 = vadd.f32 %v96, 0.0
    %s100 = sld [smem:[#allocation3 + $0x1]]
    %v101 = vstv %s100
    %v102 = vmul.f32 %v81, %v101
    %v103 = vmul.f32 %v82, %v101
    %v104 = vmul.f32 %v83, %v101
    %108 = vrot.lane.b32.xlu0 %v102, 127
    %v109 = vpop.permute.xlu0 %108
    %110 = vrot.lane.b32.xlu0 %v103, 127
    %v111 = vpop.permute.xlu0 %110
    %112 = vrot.lane.b32.xlu0 %v104, 127
    %v113 = vpop.permute.xlu0 %112
    %v117 = vadd.f32 %v89, %v109
    %v118 = vadd.f32 %v90, %v111
    %v119 = vadd.f32 %v91, %v113
    %s120 = sld [smem:[#allocation3 + $0x81]]
    %v121 = vstv %s120
    %v122 = vmul.f32 %v81, %v121
    %v123 = vmul.f32 %v82, %v121
    %v124 = vmul.f32 %v83, %v121
    %128 = vrot.lane.b32.xlu0 %v122, 127
    %v129 = vpop.permute.xlu0 %128
    %130 = vrot.lane.b32.xlu0 %v123, 127
    %v131 = vpop.permute.xlu0 %130
    %132 = vrot.lane.b32.xlu0 %v124, 127
    %v133 = vpop.permute.xlu0 %132
    %v137 = vadd.f32 %v97, %v129
    %v138 = vadd.f32 %v98, %v131
    %v139 = vadd.f32 %v99, %v133
    %s140 = sld [smem:[#allocation3 + $0x2]]
    %v141 = vstv %s140
    %v142 = vmul.f32 %v81, %v141
    %v143 = vmul.f32 %v82, %v141
    %v144 = vmul.f32 %v83, %v141
    %148 = vrot.lane.b32.xlu0 %v142, 126
    %v149 = vpop.permute.xlu0 %148
    %150 = vrot.lane.b32.xlu0 %v143, 126
    %v151 = vpop.permute.xlu0 %150
    %152 = vrot.lane.b32.xlu0 %v144, 126
    %v153 = vpop.permute.xlu0 %152
    %v157 = vadd.f32 %v117, %v149
    %v158 = vadd.f32 %v118, %v151
    %v159 = vadd.f32 %v119, %v153
    %s160 = sld [smem:[#allocation3 + $0x82]]
    %v161 = vstv %s160
    %v162 = vmul.f32 %v81, %v161
    %v163 = vmul.f32 %v82, %v161
    %v164 = vmul.f32 %v83, %v161
    %168 = vrot.lane.b32.xlu0 %v162, 126
    %v169 = vpop.permute.xlu0 %168
    %170 = vrot.lane.b32.xlu0 %v163, 126
    %v171 = vpop.permute.xlu0 %170
    %172 = vrot.lane.b32.xlu0 %v164, 126
    %v173 = vpop.permute.xlu0 %172
    %v177 = vadd.f32 %v137, %v169
    %v178 = vadd.f32 %v138, %v171
    %v179 = vadd.f32 %v139, %v173
    %s180 = scalar_lea.vmem %s2, 24
    %v181 = vld [vmem:[%s180] sm:$0xff]
    %v182 = vld [vmem:[%s180 + $0x8] sm:$0xff]
    %v183 = vld [vmem:[%s180 + $0x10] sm:$0x3f]
    %s184 = sld [smem:[#allocation3 + $0x3]]
    %v185 = vstv %s184
    %v186 = vmul.f32 %v181, %v185
    %v187 = vmul.f32 %v182, %v185
    %v188 = vmul.f32 %v183, %v185
    %v189 = vadd.f32 %v157, %v186
    %v190 = vadd.f32 %v158, %v187
    %v191 = vadd.f32 %v159, %v188
    %s192 = sld [smem:[#allocation3 + $0x83]]
    %v193 = vstv %s192
    %v194 = vmul.f32 %v181, %v193
    %v195 = vmul.f32 %v182, %v193
    %v196 = vmul.f32 %v183, %v193
    %v197 = vadd.f32 %v177, %v194
    %v198 = vadd.f32 %v178, %v195
    %v199 = vadd.f32 %v179, %v196
    %s200 = sld [smem:[#allocation3 + $0x4]]
    %v201 = vstv %s200
    %v202 = vmul.f32 %v181, %v201
    %v203 = vmul.f32 %v182, %v201
    %v204 = vmul.f32 %v183, %v201
    %208 = vrot.lane.b32.xlu0 %v202, 127
    %v209 = vpop.permute.xlu0 %208
    %210 = vrot.lane.b32.xlu0 %v203, 127
    %v211 = vpop.permute.xlu0 %210
    %212 = vrot.lane.b32.xlu0 %v204, 127
    %v213 = vpop.permute.xlu0 %212
    %v217 = vadd.f32 %v189, %v209
    %v218 = vadd.f32 %v190, %v211
    %v219 = vadd.f32 %v191, %v213
    %s220 = sld [smem:[#allocation3 + $0x84]]
    %v221 = vstv %s220
    %v222 = vmul.f32 %v181, %v221
    %v223 = vmul.f32 %v182, %v221
    %v224 = vmul.f32 %v183, %v221
    %228 = vrot.lane.b32.xlu0 %v222, 127
    %v229 = vpop.permute.xlu0 %228
    %230 = vrot.lane.b32.xlu0 %v223, 127
    %v231 = vpop.permute.xlu0 %230
    %232 = vrot.lane.b32.xlu0 %v224, 127
    %v233 = vpop.permute.xlu0 %232
    %v237 = vadd.f32 %v197, %v229
    %v238 = vadd.f32 %v198, %v231
    %v239 = vadd.f32 %v199, %v233
    %s240 = sld [smem:[#allocation3 + $0x5]]
    %v241 = vstv %s240
    %v242 = vmul.f32 %v181, %v241
    %v243 = vmul.f32 %v182, %v241
    %v244 = vmul.f32 %v183, %v241
    %248 = vrot.lane.b32.xlu0 %v242, 126
    %v249 = vpop.permute.xlu0 %248
    %250 = vrot.lane.b32.xlu0 %v243, 126
    %v251 = vpop.permute.xlu0 %250
    %252 = vrot.lane.b32.xlu0 %v244, 126
    %v253 = vpop.permute.xlu0 %252
    %v257 = vadd.f32 %v217, %v249
    %v258 = vadd.f32 %v218, %v251
    %v259 = vadd.f32 %v219, %v253
    %s260 = sld [smem:[#allocation3 + $0x85]]
    %v261 = vstv %s260
    %v262 = vmul.f32 %v181, %v261
    %v263 = vmul.f32 %v182, %v261
    %v264 = vmul.f32 %v183, %v261
    %268 = vrot.lane.b32.xlu0 %v262, 126
    %v269 = vpop.permute.xlu0 %268
    %270 = vrot.lane.b32.xlu0 %v263, 126
    %v271 = vpop.permute.xlu0 %270
    %272 = vrot.lane.b32.xlu0 %v264, 126
    %v273 = vpop.permute.xlu0 %272
    %v277 = vadd.f32 %v237, %v269
    %v278 = vadd.f32 %v238, %v271
    %v279 = vadd.f32 %v239, %v273
    %s280 = scalar_lea.vmem %s2, 48
    %v281 = vld [vmem:[%s280] sm:$0xff]
    %v282 = vld [vmem:[%s280 + $0x8] sm:$0xff]
    %v283 = vld [vmem:[%s280 + $0x10] sm:$0x3f]
    %s284 = sld [smem:[#allocation3 + $0x6]]
    %v285 = vstv %s284
    %v286 = vmul.f32 %v281, %v285
    %v287 = vmul.f32 %v282, %v285
    %v288 = vmul.f32 %v283, %v285
    %v289 = vadd.f32 %v257, %v286
    %v290 = vadd.f32 %v258, %v287
    %v291 = vadd.f32 %v259, %v288
    %s292 = sld [smem:[#allocation3 + $0x86]]
    %v293 = vstv %s292
    %v294 = vmul.f32 %v281, %v293
    %v295 = vmul.f32 %v282, %v293
    %v296 = vmul.f32 %v283, %v293
    %v297 = vadd.f32 %v277, %v294
    %v298 = vadd.f32 %v278, %v295
    %v299 = vadd.f32 %v279, %v296
    %s300 = sld [smem:[#allocation3 + $0x7]]
    %v301 = vstv %s300
    %v302 = vmul.f32 %v281, %v301
    %v303 = vmul.f32 %v282, %v301
    %v304 = vmul.f32 %v283, %v301
    %308 = vrot.lane.b32.xlu0 %v302, 127
    %v309 = vpop.permute.xlu0 %308
    %310 = vrot.lane.b32.xlu0 %v303, 127
    %v311 = vpop.permute.xlu0 %310
    %312 = vrot.lane.b32.xlu0 %v304, 127
    %v313 = vpop.permute.xlu0 %312
    %v317 = vadd.f32 %v289, %v309
    %v318 = vadd.f32 %v290, %v311
    %v319 = vadd.f32 %v291, %v313
    %s320 = sld [smem:[#allocation3 + $0x87]]
    %v321 = vstv %s320
    %v322 = vmul.f32 %v281, %v321
    %v323 = vmul.f32 %v282, %v321
    %v324 = vmul.f32 %v283, %v321
    %328 = vrot.lane.b32.xlu0 %v322, 127
    %v329 = vpop.permute.xlu0 %328
    %330 = vrot.lane.b32.xlu0 %v323, 127
    %v331 = vpop.permute.xlu0 %330
    %332 = vrot.lane.b32.xlu0 %v324, 127
    %v333 = vpop.permute.xlu0 %332
    %v337 = vadd.f32 %v297, %v329
    %v338 = vadd.f32 %v298, %v331
    %v339 = vadd.f32 %v299, %v333
    %s340 = sld [smem:[#allocation3 + $0x8]]
    %v341 = vstv %s340
    %v342 = vmul.f32 %v281, %v341
    %v343 = vmul.f32 %v282, %v341
    %v344 = vmul.f32 %v283, %v341
    %348 = vrot.lane.b32.xlu0 %v342, 126
    %v349 = vpop.permute.xlu0 %348
    %350 = vrot.lane.b32.xlu0 %v343, 126
    %v351 = vpop.permute.xlu0 %350
    %352 = vrot.lane.b32.xlu0 %v344, 126
    %v353 = vpop.permute.xlu0 %352
    %v357 = vadd.f32 %v317, %v349
    %v358 = vadd.f32 %v318, %v351
    %v359 = vadd.f32 %v319, %v353
    %s360 = sld [smem:[#allocation3 + $0x88]]
    %v361 = vstv %s360
    %v362 = vmul.f32 %v281, %v361
    %v363 = vmul.f32 %v282, %v361
    %v364 = vmul.f32 %v283, %v361
    %368 = vrot.lane.b32.xlu0 %v362, 126
    %v369 = vpop.permute.xlu0 %368
    %370 = vrot.lane.b32.xlu0 %v363, 126
    %v371 = vpop.permute.xlu0 %370
    %372 = vrot.lane.b32.xlu0 %v364, 126
    %v373 = vpop.permute.xlu0 %372
    %v377 = vadd.f32 %v337, %v369
    %v378 = vadd.f32 %v338, %v371
    %v379 = vadd.f32 %v339, %v373
    %s380 = sld [smem:[#allocation5]]
    %v381 = vstv %s380
    %v382 = vadd.f32 %v357, %v381
    %v383 = vadd.f32 %v358, %v381
    %v384 = vadd.f32 %v359, %v381
    %vm385 = vcmp.ge.f32.partialorder %v382, 0.0
    %vm386 = vcmp.ge.f32.partialorder %v383, 0.0
    %vm387 = vcmp.ge.f32.partialorder %v384, 0.0
    %v388 = vmul.f32 %v382, 0.01
    %v389 = vmul.f32 %v383, 0.01
    %v390 = vmul.f32 %v384, 0.01
    %v391 = vsel %vm385, %v382, %v388
    %v392 = vsel %vm386, %v383, %v389
    %v393 = vsel %vm387, %v384, %v390
    %s394 = sld [smem:[#allocation5 + $0x1]]
    %v395 = vstv %s394
    %v396 = vadd.f32 %v377, %v395
    %v397 = vadd.f32 %v378, %v395
    %v398 = vadd.f32 %v379, %v395
    %vm399 = vcmp.ge.f32.partialorder %v396, 0.0
    %vm400 = vcmp.ge.f32.partialorder %v397, 0.0
    %vm401 = vcmp.ge.f32.partialorder %v398, 0.0
    %v402 = vmul.f32 %v396, 0.01
    %v403 = vmul.f32 %v397, 0.01
    %v404 = vmul.f32 %v398, 0.01
    %v405 = vsel %vm399, %v396, %v402
    %v406 = vsel %vm400, %v397, %v403
    %v407 = vsel %vm401, %v398, %v404
    %v408 = vpack.c.bf16 %v392, %v391
    %v409 = vpack.c.bf16 %v393, %v393
    %v410 = vld [vmem:[%s4] sm:$0xf]
    %v411 = vld [vmem:[%s4 + $0x4] sm:$0xf]
    %v412 = vld [vmem:[%s4 + $0x8] sm:$0xf]
    %v413 = vld [vmem:[%s4 + $0xc] sm:$0xf]
    %v414 = vld [vmem:[%s4 + $0x10] sm:$0xf]
    %v415 = vld [vmem:[%s4 + $0x14] sm:$0xf]
    %v416 = vpack.c.bf16 %v406, %v405
    %v417 = vpack.c.bf16 %v407, %v407
    %v418 = vld [vmem:[%s5] sm:$0xf]
    %v419 = vld [vmem:[%s5 + $0x4] sm:$0xf]
    %v420 = vld [vmem:[%s5 + $0x8] sm:$0xf]
    %v421 = vld [vmem:[%s5 + $0xc] sm:$0xf]
    %v422 = vld [vmem:[%s5 + $0x10] sm:$0xf]
    %v423 = vld [vmem:[%s5 + $0x14] sm:$0xf]
    %v430 = vunpack.c.l.b16 %v418
    %v431 = vunpack.c.l.b16 %v419
    %v432 = vunpack.c.l.b16 %v420
    %v433 = vunpack.c.l.b16 %v421
    %v434 = vunpack.c.l.b16 %v422
    %v435 = vunpack.c.l.b16 %v423
    %v436 = vpack.c.b16 %v431, %v430
    %v437 = vpack.c.b16 %v433, %v432
    %v438 = vpack.c.b16 %v435, %v434
    %vm442 = vcmask 392192
    %v444 = vsel %vm442, %v416, 0
    %v447 = vsel %vm442, %v417, 0
    %449 = vmatprep.subr.bf16.mxu0 0
    %450 = vmatpush1.bf16.msra.mxu0 %v436
    %451 = vmatprep.subr.bf16.mxu0 0
    %452 = vmatpush1.bf16.msra.mxu0 %v437
    %453 = vmatprep.subr.bf16.mxu0 0
    %454 = vmatpush1.bf16.msra.mxu0 %v438
    %455 = vmatprep.subr.bf16.mxu0 0
    %456 = vmatpush1.bf16.msra.mxu0 0
    %457 = vmatprep.subr.bf16.mxu0 0
    %458 = vmatpush1.bf16.msra.mxu0 0
    %459 = vmatprep.subr.bf16.mxu0 0
    %460 = vmatpush1.bf16.msra.mxu0 0
    %461 = vmatprep.subr.bf16.mxu0 0
    %462 = vmatpush1.bf16.msra.mxu0 0
    %463 = vmatprep.subr.bf16.mxu0 0
    %464 = vmatpush1.bf16.msra.mxu0 0
    %465 = vmatprep.subr.bf16.mxu0 0
    %466 = vmatpush1.bf16.msra.mxu0 0
    %467 = vmatprep.subr.bf16.mxu0 0
    %468 = vmatpush1.bf16.msra.mxu0 0
    %469 = vmatprep.subr.bf16.mxu0 0
    %470 = vmatpush1.bf16.msra.mxu0 0
    %471 = vmatprep.subr.bf16.mxu0 0
    %472 = vmatpush1.bf16.msra.mxu0 0
    %473 = vmatprep.subr.bf16.mxu0 0
    %474 = vmatpush1.bf16.msra.mxu0 0
    %475 = vmatprep.subr.bf16.mxu0 0
    %476 = vmatpush1.bf16.msra.mxu0 0
    %477 = vmatprep.subr.bf16.mxu0 0
    %478 = vmatpush1.bf16.msra.mxu0 0
    %479 = vmatprep.subr.bf16.mxu0 0
    %480 = vmatpush1.bf16.msra.mxu0 0
    %481 = vmatprep.mubr.bf16.mxu0 0
    %482 = vmatmul.mubr.bf16.gmra.mrb[0].mxu0 %v444
    %v483 = vpop.f32.mrb[0].mxu0
    %v484 = vadd.f32 0.0, %v483
    %v485 = vpop.f32.mrb[0].mxu0
    %v486 = vpop.f32.mrb[0].mxu0
    %v487 = vadd.f32 0.0, %v486
    %v488 = vpop.f32.mrb[0].mxu0
    %489 = vmatprep.mubr.bf16.mxu0 0
    %490 = vmatmul.mubr.bf16.gmra.mrb[0].mxu0 %v447
    %v491 = vpop.f32.mrb[0].mxu0
    %v492 = vadd.f32 0.0, %v491
    %v493 = vpop.f32.mrb[0].mxu0
    %v494 = vpop.f32.mrb[0].mxu0
    %v495 = vpop.f32.mrb[0].mxu0
    %496 = vdwg.mxu0
    %v503 = vunpack.c.l.b16 %v410
    %v504 = vunpack.c.l.b16 %v411
    %v505 = vunpack.c.l.b16 %v412
    %v506 = vunpack.c.l.b16 %v413
    %v507 = vunpack.c.l.b16 %v414
    %v508 = vunpack.c.l.b16 %v415
    %v509 = vpack.c.b16 %v504, %v503
    %v510 = vpack.c.b16 %v506, %v505
    %v511 = vpack.c.b16 %v508, %v507
    %v516 = vsel %vm442, %v408, 0
    %v519 = vsel %vm442, %v409, 0
    %521 = vmatprep.subr.bf16.mxu0 0
    %522 = vmatpush1.bf16.msra.mxu0 %v509
    %523 = vmatprep.subr.bf16.mxu0 0
    %524 = vmatpush1.bf16.msra.mxu0 %v510
    %525 = vmatprep.subr.bf16.mxu0 0
    %526 = vmatpush1.bf16.msra.mxu0 %v511
    %527 = vmatprep.subr.bf16.mxu0 0
    %528 = vmatpush1.bf16.msra.mxu0 0
    %529 = vmatprep.subr.bf16.mxu0 0
    %530 = vmatpush1.bf16.msra.mxu0 0
    %531 = vmatprep.subr.bf16.mxu0 0
    %532 = vmatpush1.bf16.msra.mxu0 0
    %533 = vmatprep.subr.bf16.mxu0 0
    %534 = vmatpush1.bf16.msra.mxu0 0
    %535 = vmatprep.subr.bf16.mxu0 0
    %536 = vmatpush1.bf16.msra.mxu0 0
    %537 = vmatprep.subr.bf16.mxu0 0
    %538 = vmatpush1.bf16.msra.mxu0 0
    %539 = vmatprep.subr.bf16.mxu0 0
    %540 = vmatpush1.bf16.msra.mxu0 0
    %541 = vmatprep.subr.bf16.mxu0 0
    %542 = vmatpush1.bf16.msra.mxu0 0
    %543 = vmatprep.subr.bf16.mxu0 0
    %544 = vmatpush1.bf16.msra.mxu0 0
    %545 = vmatprep.subr.bf16.mxu0 0
    %546 = vmatpush1.bf16.msra.mxu0 0
    %547 = vmatprep.subr.bf16.mxu0 0
    %548 = vmatpush1.bf16.msra.mxu0 0
    %549 = vmatprep.subr.bf16.mxu0 0
    %550 = vmatpush1.bf16.msra.mxu0 0
    %551 = vmatprep.subr.bf16.mxu0 0
    %552 = vmatpush1.bf16.msra.mxu0 0
    %553 = vmatprep.mubr.bf16.mxu0 0
    %554 = vmatmul.mubr.bf16.gmra.mrb[0].mxu0 %v516
    %v555 = vpop.f32.mrb[0].mxu0
    %v556 = vadd.f32 %v484, %v555
    %v557 = vpop.f32.mrb[0].mxu0
    %v558 = vpop.f32.mrb[0].mxu0
    %v559 = vadd.f32 %v487, %v558
    %v560 = vpop.f32.mrb[0].mxu0
    %561 = vmatprep.mubr.bf16.mxu0 0
    %562 = vmatmul.mubr.bf16.gmra.mrb[0].mxu0 %v519
    %v563 = vpop.f32.mrb[0].mxu0
    %v564 = vadd.f32 %v492, %v563
    %v565 = vpop.f32.mrb[0].mxu0
    %v566 = vpop.f32.mrb[0].mxu0
    %v567 = vpop.f32.mrb[0].mxu0
    %568 = vdwg.mxu0
    %v569 = vld [vmem:[%s6] sm:$0x1]
    %v571 = vlaneseq
    %v572 = vshrl.u32 %v571, 7
    %v573 = vsub.s32 0, %v572
    %v574 = vrot.slane %v569, %v573
    %v576 = vadd.f32 %v556, %v574
    %v577 = vadd.f32 %v559, %v574
    %v578 = vadd.f32 %v564, %v574
    %vm579 = vcmp.ge.f32.partialorder %v576, 0.0
    %vm580 = vcmp.ge.f32.partialorder %v577, 0.0
    %vm581 = vcmp.ge.f32.partialorder %v578, 0.0
    %v582 = vmul.f32 %v576, 0.01
    %v583 = vmul.f32 %v577, 0.01
    %v584 = vmul.f32 %v578, 0.01
    %v585 = vsel %vm579, %v576, %v582
    %v586 = vsel %vm580, %v577, %v583
    %v587 = vsel %vm581, %v578, %v584
    %v588 = vpack.c.bf16 %v586, %v585
    %v589 = vpack.c.bf16 %v587, %v587
    %v590 = vld [vmem:[%s7] sm:$0xff]
    %v591 = vld [vmem:[%s7 + $0x8] sm:$0xff]
    %v592 = vld [vmem:[%s7 + $0x10] sm:$0x33]
    %v593 = vld [vmem:[%s3] sm:$0xff]
    %v594 = vld [vmem:[%s3 + $0x8] sm:$0xff]
    %v595 = vld [vmem:[%s3 + $0x10] sm:$0x3f]
    %v596 = vld [vmem:[%s8] sm:$0x3]
    %598 = vset.pattern.permute.xlu0 0
    %599 = vperm.xlu0 %598, %v593
    %v600 = vpop.permute.xlu0 %599
    %603 = vset.pattern.permute.xlu0 0
    %604 = vperm.xlu0 %603, %v594
    %v605 = vpop.permute.xlu0 %604
    %608 = vset.pattern.permute.xlu0 0
    %609 = vperm.xlu0 %608, %v595
    %v610 = vpop.permute.xlu0 %609
    %v613 = vlaneseq
    %v614 = vshrl.u32 %v613, 7
    %v615 = vsub.s32 0, %v614
    %v616 = vrot.slane %v596, %v615
    %v617 = vlaneseq
    %v618 = vshrl.u32 %v617, 7
    %v619 = vsub.s32 1, %v618
    %v620 = vrot.slane %v596, %v619
    %v623 = vmul.f32 %v600, %v616
    %v624 = vmul.f32 %v600, %v620
    %v625 = vmul.f32 %v605, %v616
    %v626 = vmul.f32 %v605, %v620
    %v627 = vmul.f32 %v610, %v616
    %v628 = vmul.f32 %v610, %v620
    %v632 = vunpack.c.l.b16 %v590
    %v633 = vunpack.c.h.b16 %v590
    %v634 = vunpack.c.l.b16 %v591
    %v635 = vunpack.c.h.b16 %v591
    %v636 = vunpack.c.l.b16 %v592
    %v637 = vunpack.c.h.b16 %v592
    %v638 = vpack.c.b16 %v634, %v632
    %v639 = vpack.c.b16 %v635, %v633
    %v640 = vpack.c.b16 %v636, %v636
    %v641 = vpack.c.b16 %v637, %v637
    %vm644 = vcmask 162816
    %v646 = vsel %vm644, %v588, 0
    %v649 = vsel %vm644, %v589, 0
    %vm651 = vcmask 1041408
    %v653 = vsel %vm651, %v640, 0
    %v656 = vsel %vm651, %v641, 0
    %658 = vmatprep.subr.bf16.mxu0 %v639
    %659 = vmatpush1.bf16.msra.mxu0 %v638
    %660 = vmatprep.subr.bf16.mxu0 %v656
    %661 = vmatpush1.bf16.msra.mxu0 %v653
    %662 = vmatprep.subr.bf16.mxu0 0
    %663 = vmatpush1.bf16.msra.mxu0 0
    %664 = vmatprep.subr.bf16.mxu0 0
    %665 = vmatpush1.bf16.msra.mxu0 0
    %666 = vmatprep.subr.bf16.mxu0 0
    %667 = vmatpush1.bf16.msra.mxu0 0
    %668 = vmatprep.subr.bf16.mxu0 0
    %669 = vmatpush1.bf16.msra.mxu0 0
    %670 = vmatprep.subr.bf16.mxu0 0
    %671 = vmatpush1.bf16.msra.mxu0 0
    %672 = vmatprep.subr.bf16.mxu0 0
    %673 = vmatpush1.bf16.msra.mxu0 0
    %674 = vmatprep.subr.bf16.mxu0 0
    %675 = vmatpush1.bf16.msra.mxu0 0
    %676 = vmatprep.subr.bf16.mxu0 0
    %677 = vmatpush1.bf16.msra.mxu0 0
    %678 = vmatprep.subr.bf16.mxu0 0
    %679 = vmatpush1.bf16.msra.mxu0 0
    %680 = vmatprep.subr.bf16.mxu0 0
    %681 = vmatpush1.bf16.msra.mxu0 0
    %682 = vmatprep.subr.bf16.mxu0 0
    %683 = vmatpush1.bf16.msra.mxu0 0
    %684 = vmatprep.subr.bf16.mxu0 0
    %685 = vmatpush1.bf16.msra.mxu0 0
    %686 = vmatprep.subr.bf16.mxu0 0
    %687 = vmatpush1.bf16.msra.mxu0 0
    %688 = vmatprep.subr.bf16.mxu0 0
    %689 = vmatpush1.bf16.msra.mxu0 0
    %690 = vmatprep.mubr.bf16.mxu0 0
    %691 = vmatmul.mubr.bf16.gmra.mrb[0].mxu0 %v646
    %v692 = vpop.f32.mrb[0].mxu0
    %v693 = vadd.f32 %v623, %v692
    %v694 = vpop.f32.mrb[0].mxu0
    %v695 = vadd.f32 %v624, %v694
    %v696 = vpop.f32.mrb[0].mxu0
    %v697 = vadd.f32 %v625, %v696
    %v698 = vpop.f32.mrb[0].mxu0
    %v699 = vadd.f32 %v626, %v698
    %700 = vmatprep.mubr.bf16.mxu0 0
    %701 = vmatmul.mubr.bf16.gmra.mrb[0].mxu0 %v649
    %v702 = vpop.f32.mrb[0].mxu0
    %v703 = vadd.f32 %v627, %v702
    %v704 = vpop.f32.mrb[0].mxu0
    %v705 = vadd.f32 %v628, %v704
    %v706 = vpop.f32.mrb[0].mxu0
    %v707 = vpop.f32.mrb[0].mxu0
    %708 = vdwg.mxu0
    %v709 = vld [vmem:[%s9] sm:$0x3]
    %v711 = vlaneseq
    %v712 = vshrl.u32 %v711, 7
    %v713 = vsub.s32 0, %v712
    %v714 = vrot.slane %v709, %v713
    %v715 = vlaneseq
    %v716 = vshrl.u32 %v715, 7
    %v717 = vsub.s32 1, %v716
    %v718 = vrot.slane %v709, %v717
    %v721 = vadd.f32 %v693, %v714
    %v722 = vadd.f32 %v695, %v718
    %v723 = vadd.f32 %v697, %v714
    %v724 = vadd.f32 %v699, %v718
    %v725 = vadd.f32 %v703, %v714
    %v726 = vadd.f32 %v705, %v718
    %vm727 = vcmp.ge.f32.partialorder %v721, 0.0
    %vm728 = vcmp.ge.f32.partialorder %v722, 0.0
    %vm729 = vcmp.ge.f32.partialorder %v723, 0.0
    %vm730 = vcmp.ge.f32.partialorder %v724, 0.0
    %vm731 = vcmp.ge.f32.partialorder %v725, 0.0
    %vm732 = vcmp.ge.f32.partialorder %v726, 0.0
    %v733 = vmul.f32 %v721, 0.01
    %v734 = vmul.f32 %v722, 0.01
    %v735 = vmul.f32 %v723, 0.01
    %v736 = vmul.f32 %v724, 0.01
    %v737 = vmul.f32 %v725, 0.01
    %v738 = vmul.f32 %v726, 0.01
    %v739 = vsel %vm727, %v721, %v733
    %v740 = vsel %vm728, %v722, %v734
    %v741 = vsel %vm729, %v723, %v735
    %v742 = vsel %vm730, %v724, %v736
    %v743 = vsel %vm731, %v725, %v737
    %v744 = vsel %vm732, %v726, %v738
    %v745 = vld [vmem:[%s10] sm:$0xff]
    %v746 = vld [vmem:[%s10 + $0x8] sm:$0xff]
    %v747 = vld [vmem:[%s10 + $0x10] sm:$0xff]
    %v748 = vld [vmem:[%s10 + $0x18] sm:$0xff]
    %v749 = vld [vmem:[%s10 + $0x20] sm:$0x3f]
    %v750 = vld [vmem:[%s10 + $0x28] sm:$0x3f]
    %v751 = vmul.f32 %v739, %v745
    %v752 = vmul.f32 %v740, %v746
    %v753 = vmul.f32 %v741, %v747
    %v754 = vmul.f32 %v742, %v748
    %v755 = vmul.f32 %v743, %v749
    %v756 = vmul.f32 %v744, %v750
    %v757 = vld [vmem:[%s11] sm:$0x3]
    %vm758 = vcmask 179200
    %v760 = vsel %vm758, %v757, 0
    %vm762 = vcmask 1045504
    %v764 = vsel %vm762, %v755, 0
    %v767 = vsel %vm762, %v756, 0
    %769 = vmatprep.subr.mxu0 %v752
    %770 = vmatpush1.msra.mxu0 %v751
    %771 = vmatprep.subr.mxu0 %v754
    %772 = vmatpush1.msra.mxu0 %v753
    %773 = vmatprep.subr.mxu0 %v767
    %774 = vmatpush1.msra.mxu0 %v764
    %775 = vmatprep.subr.mxu0 0.0
    %776 = vmatpush1.msra.mxu0 0.0
    %777 = vmatprep.subr.mxu0 0.0
    %778 = vmatpush1.msra.mxu0 0.0
    %779 = vmatprep.subr.mxu0 0.0
    %780 = vmatpush1.msra.mxu0 0.0
    %781 = vmatprep.subr.mxu0 0.0
    %782 = vmatpush1.msra.mxu0 0.0
    %783 = vmatprep.subr.mxu0 0.0
    %784 = vmatpush1.msra.mxu0 0.0
    %785 = vmatprep.subr.mxu0 0.0
    %786 = vmatpush1.msra.mxu0 0.0
    %787 = vmatprep.subr.mxu0 0.0
    %788 = vmatpush1.msra.mxu0 0.0
    %789 = vmatprep.subr.mxu0 0.0
    %790 = vmatpush1.msra.mxu0 0.0
    %791 = vmatprep.subr.mxu0 0.0
    %792 = vmatpush1.msra.mxu0 0.0
    %793 = vmatprep.subr.mxu0 0.0
    %794 = vmatpush1.msra.mxu0 0.0
    %795 = vmatprep.subr.mxu0 0.0
    %796 = vmatpush1.msra.mxu0 0.0
    %797 = vmatprep.subr.mxu0 0.0
    %798 = vmatpush1.msra.mxu0 0.0
    %799 = vmatprep.subr.mxu0 0.0
    %800 = vmatpush1.msra.mxu0 0.0
    %801 = vmatprep.subr.mxu0 0.0
    %802 = vmatpush1.msra.mxu0 0.0
    %803 = vmatprep.subr.mxu0 0.0
    %804 = vmatpush1.msra.mxu0 0.0
    %805 = vmatprep.subr.mxu0 0.0
    %806 = vmatpush1.msra.mxu0 0.0
    %807 = vmatprep.subr.mxu0 0.0
    %808 = vmatpush1.msra.mxu0 0.0
    %809 = vmatprep.subr.mxu0 0.0
    %810 = vmatpush1.msra.mxu0 0.0
    %811 = vmatprep.subr.mxu0 0.0
    %812 = vmatpush1.msra.mxu0 0.0
    %813 = vmatprep.subr.mxu0 0.0
    %814 = vmatpush1.msra.mxu0 0.0
    %815 = vmatprep.subr.mxu0 0.0
    %816 = vmatpush1.msra.mxu0 0.0
    %817 = vmatprep.subr.mxu0 0.0
    %818 = vmatpush1.msra.mxu0 0.0
    %819 = vmatprep.subr.mxu0 0.0
    %820 = vmatpush1.msra.mxu0 0.0
    %821 = vmatprep.subr.mxu0 0.0
    %822 = vmatpush1.msra.mxu0 0.0
    %823 = vmatprep.subr.mxu0 0.0
    %824 = vmatpush1.msra.mxu0 0.0
    %825 = vmatprep.subr.mxu0 0.0
    %826 = vmatpush1.msra.mxu0 0.0
    %827 = vmatprep.subr.mxu0 0.0
    %828 = vmatpush1.msra.mxu0 0.0
    %829 = vmatprep.subr.mxu0 0.0
    %830 = vmatpush1.msra.mxu0 0.0
    %831 = vmatprep.subr.mxu0 0.0
    %832 = vmatpush1.msra.mxu0 0.0
    %833 = vmatprep.mubr.f32.mxu0 0.0
    %834 = vmatmul.mubr.f32.gmra.mrb[0].mxu0 %v760
    %v835 = vpop.f32.mrb[0].mxu0
    %v836 = vadd.f32 0.0, %v835
    %v837 = vpop.f32.mrb[0].mxu0
    %v838 = vadd.f32 0.0, %v837
    %839 = vdwg.mxu0
    %v840 = vpack.c.bf16 %v836, %v836
    %v841 = vpack.c.bf16 %v838, %v838
    %v842 = vld [vmem:[%s12] sm:$0xf]
    %v843 = vld [vmem:[%s12 + $0x4] sm:$0xf]
    %v844 = vld [vmem:[%s12 + $0x8] sm:$0xf]
    %v845 = vld [vmem:[%s12 + $0xc] sm:$0xf]
    %v846 = vld [vmem:[%s12 + $0x10] sm:$0xf]
    %v847 = vld [vmem:[%s12 + $0x14] sm:$0xf]
    %v848 = vld [vmem:[%s12 + $0x18] sm:$0xf]
    %v849 = vld [vmem:[%s12 + $0x1c] sm:$0xf]
    %v850 = vld [vmem:[%s12 + $0x20] sm:$0xf]
    %v851 = vld [vmem:[%s12 + $0x24] sm:$0xf]
    %v852 = vld [vmem:[%s12 + $0x28] sm:$0xf]
    %v853 = vld [vmem:[%s12 + $0x2c] sm:$0xf]
    %v854 = vld [vmem:[%s12 + $0x30] sm:$0xf]
    %v855 = vld [vmem:[%s12 + $0x34] sm:$0xf]
    %v856 = vld [vmem:[%s12 + $0x38] sm:$0xf]
    %v857 = vld [vmem:[%s12 + $0x3c] sm:$0xf]
    %v858 = vld [vmem:[%s12 + $0x40] sm:$0xf]
    %v859 = vld [vmem:[%s12 + $0x44] sm:$0xf]
    %v860 = vld [vmem:[%s12 + $0x48] sm:$0xf]
    %v861 = vld [vmem:[%s12 + $0x4c] sm:$0xf]
    %v862 = vld [vmem:[%s12 + $0x50] sm:$0xf]
    %v863 = vld [vmem:[%s12 + $0x54] sm:$0xf]
    %v864 = vld [vmem:[%s12 + $0x58] sm:$0xf]
    %v865 = vld [vmem:[%s12 + $0x5c] sm:$0xf]
    %v866 = vld [vmem:[%s12 + $0x60] sm:$0xf]
    %v867 = vld [vmem:[%s12 + $0x64] sm:$0xf]
    %v868 = vld [vmem:[%s12 + $0x68] sm:$0xf]
    %v869 = vld [vmem:[%s12 + $0x6c] sm:$0x3]
    %v870 = vld [vmem:[%s13] sm:$0x1]
    %v872 = vlaneseq
    %v873 = vshrl.u32 %v872, 7
    %v874 = vsub.s32 0, %v873
    %v875 = vrot.slane %v870, %v874
    %v905 = vunpack.c.l.b16 %v842
    %v906 = vunpack.c.l.b16 %v843
    %v907 = vunpack.c.l.b16 %v844
    %v908 = vunpack.c.l.b16 %v845
    %v909 = vunpack.c.l.b16 %v846
    %v910 = vunpack.c.l.b16 %v847
    %v911 = vunpack.c.l.b16 %v848
    %v912 = vunpack.c.l.b16 %v849
    %v913 = vunpack.c.l.b16 %v850
    %v914 = vunpack.c.l.b16 %v851
    %v915 = vunpack.c.l.b16 %v852
    %v916 = vunpack.c.l.b16 %v853
    %v917 = vunpack.c.l.b16 %v854
    %v918 = vunpack.c.l.b16 %v855
    %v919 = vunpack.c.l.b16 %v856
    %v920 = vunpack.c.l.b16 %v857
    %v921 = vunpack.c.l.b16 %v858
    %v922 = vunpack.c.l.b16 %v859
    %v923 = vunpack.c.l.b16 %v860
    %v924 = vunpack.c.l.b16 %v861
    %v925 = vunpack.c.l.b16 %v862
    %v926 = vunpack.c.l.b16 %v863
    %v927 = vunpack.c.l.b16 %v864
    %v928 = vunpack.c.l.b16 %v865
    %v929 = vunpack.c.l.b16 %v866
    %v930 = vunpack.c.l.b16 %v867
    %v931 = vunpack.c.l.b16 %v868
    %v932 = vunpack.c.l.b16 %v869
    %v933 = vpack.c.b16 %v906, %v905
    %v934 = vpack.c.b16 %v908, %v907
    %v935 = vpack.c.b16 %v910, %v909
    %v936 = vpack.c.b16 %v912, %v911
    %v937 = vpack.c.b16 %v914, %v913
    %v938 = vpack.c.b16 %v916, %v915
    %v939 = vpack.c.b16 %v918, %v917
    %v940 = vpack.c.b16 %v920, %v919
    %v941 = vpack.c.b16 %v922, %v921
    %v942 = vpack.c.b16 %v924, %v923
    %v943 = vpack.c.b16 %v926, %v925
    %v944 = vpack.c.b16 %v928, %v927
    %v945 = vpack.c.b16 %v930, %v929
    %v946 = vpack.c.b16 %v932, %v931
    %vm960 = vcmask 752640
    %v962 = vsel %vm960, %v841, 0
    %v965 = vsel %vm762, %v946, 0
    %967 = vmatprep.subr.bf16.mxu0 0
    %968 = vmatpush1.bf16.msra.mxu0 %v933
    %969 = vmatprep.subr.bf16.mxu0 0
    %970 = vmatpush1.bf16.msra.mxu0 %v934
    %971 = vmatprep.subr.bf16.mxu0 0
    %972 = vmatpush1.bf16.msra.mxu0 %v935
    %973 = vmatprep.subr.bf16.mxu0 0
    %974 = vmatpush1.bf16.msra.mxu0 %v936
    %975 = vmatprep.subr.bf16.mxu0 0
    %976 = vmatpush1.bf16.msra.mxu0 %v937
    %977 = vmatprep.subr.bf16.mxu0 0
    %978 = vmatpush1.bf16.msra.mxu0 %v938
    %979 = vmatprep.subr.bf16.mxu0 0
    %980 = vmatpush1.bf16.msra.mxu0 %v939
    %981 = vmatprep.subr.bf16.mxu0 0
    %982 = vmatpush1.bf16.msra.mxu0 %v940
    %983 = vmatprep.subr.bf16.mxu0 0
    %984 = vmatpush1.bf16.msra.mxu0 %v941
    %985 = vmatprep.subr.bf16.mxu0 0
    %986 = vmatpush1.bf16.msra.mxu0 %v942
    %987 = vmatprep.subr.bf16.mxu0 0
    %988 = vmatpush1.bf16.msra.mxu0 %v943
    %989 = vmatprep.subr.bf16.mxu0 0
    %990 = vmatpush1.bf16.msra.mxu0 %v944
    %991 = vmatprep.subr.bf16.mxu0 0
    %992 = vmatpush1.bf16.msra.mxu0 %v945
    %993 = vmatprep.subr.bf16.mxu0 0
    %994 = vmatpush1.bf16.msra.mxu0 %v965
    %995 = vmatprep.subr.bf16.mxu0 0
    %996 = vmatpush1.bf16.msra.mxu0 0
    %997 = vmatprep.subr.bf16.mxu0 0
    %998 = vmatpush1.bf16.msra.mxu0 0
    %999 = vmatprep.mubr.bf16.mxu0 %v962
    %1000 = vmatmul.mubr.bf16.gmra.mrb[0].mxu0 %v840
    %v1001 = vpop.f32.mrb[0].mxu0
    %v1002 = vadd.f32 %v875, %v1001
    %v1003 = vpop.f32.mrb[0].mxu0
    %v1004 = vpop.f32.mrb[0].mxu0
    %v1005 = vpop.f32.mrb[0].mxu0
    %1006 = vdwg.mxu0
    %vm1007 = vcmp.ge.f32.partialorder %v1002, 0.0
    %v1008 = vmul.f32 %v1002, 0.01
    %v1009 = vsel %vm1007, %v1002, %v1008
    %v1010 = vld [vmem:[%s14] sm:$0xff]
    %v1011 = vld [vmem:[%s14 + $0x8] sm:$0xff]
    %v1012 = vld [vmem:[%s14 + $0x10] sm:$0xff]
    %v1013 = vld [vmem:[%s14 + $0x18] sm:$0xff]
    %v1014 = vld [vmem:[%s14 + $0x20] sm:$0xff]
    %v1015 = vld [vmem:[%s14 + $0x28] sm:$0xff]
    %v1016 = vld [vmem:[%s14 + $0x30] sm:$0xff]
    %v1017 = vld [vmem:[%s14 + $0x38] sm:$0xff]
    %v1018 = vld [vmem:[%s14 + $0x40] sm:$0xff]
    %v1019 = vld [vmem:[%s14 + $0x48] sm:$0xff]
    %v1020 = vld [vmem:[%s14 + $0x50] sm:$0xff]
    %v1021 = vld [vmem:[%s14 + $0x58] sm:$0xff]
    %v1022 = vld [vmem:[%s14 + $0x60] sm:$0xff]
    %v1023 = vld [vmem:[%s14 + $0x68] sm:$0xff]
    %v1024 = vld [vmem:[%s14 + $0x70] sm:$0xff]
    %v1025 = vld [vmem:[%s14 + $0x78] sm:$0xff]
    %v1026 = vld [vmem:[#allocation2] sm:$0x1]
    %v1028 = vlaneseq
    %v1029 = vshrl.u32 %v1028, 7
    %v1030 = vsub.s32 0, %v1029
    %v1031 = vrot.slane %v1026, %v1030
    %1033 = vmatprep.subr.mxu0 0.0
    %1034 = vmatpush1.msra.mxu0 %v1010
    %1035 = vmatprep.subr.mxu0 0.0
    %1036 = vmatpush1.msra.mxu0 %v1011
    %1037 = vmatprep.subr.mxu0 0.0
    %1038 = vmatpush1.msra.mxu0 %v1012
    %1039 = vmatprep.subr.mxu0 0.0
    %1040 = vmatpush1.msra.mxu0 %v1013
    %1041 = vmatprep.subr.mxu0 0.0
    %1042 = vmatpush1.msra.mxu0 %v1014
    %1043 = vmatprep.subr.mxu0 0.0
    %1044 = vmatpush1.msra.mxu0 %v1015
    %1045 = vmatprep.subr.mxu0 0.0
    %1046 = vmatpush1.msra.mxu0 %v1016
    %1047 = vmatprep.subr.mxu0 0.0
    %1048 = vmatpush1.msra.mxu0 %v1017
    %1049 = vmatprep.subr.mxu0 0.0
    %1050 = vmatpush1.msra.mxu0 %v1018
    %1051 = vmatprep.subr.mxu0 0.0
    %1052 = vmatpush1.msra.mxu0 %v1019
    %1053 = vmatprep.subr.mxu0 0.0
    %1054 = vmatpush1.msra.mxu0 %v1020
    %1055 = vmatprep.subr.mxu0 0.0
    %1056 = vmatpush1.msra.mxu0 %v1021
    %1057 = vmatprep.subr.mxu0 0.0
    %1058 = vmatpush1.msra.mxu0 %v1022
    %1059 = vmatprep.subr.mxu0 0.0
    %1060 = vmatpush1.msra.mxu0 %v1023
    %1061 = vmatprep.subr.mxu0 0.0
    %1062 = vmatpush1.msra.mxu0 %v1024
    %1063 = vmatprep.subr.mxu0 0.0
    %1064 = vmatpush1.msra.mxu0 %v1025
    %1065 = vmatprep.subr.mxu0 0.0
    %1066 = vmatpush1.msra.mxu0 0.0
    %1067 = vmatprep.subr.mxu0 0.0
    %1068 = vmatpush1.msra.mxu0 0.0
    %1069 = vmatprep.subr.mxu0 0.0
    %1070 = vmatpush1.msra.mxu0 0.0
    %1071 = vmatprep.subr.mxu0 0.0
    %1072 = vmatpush1.msra.mxu0 0.0
    %1073 = vmatprep.subr.mxu0 0.0
    %1074 = vmatpush1.msra.mxu0 0.0
    %1075 = vmatprep.subr.mxu0 0.0
    %1076 = vmatpush1.msra.mxu0 0.0
    %1077 = vmatprep.subr.mxu0 0.0
    %1078 = vmatpush1.msra.mxu0 0.0
    %1079 = vmatprep.subr.mxu0 0.0
    %1080 = vmatpush1.msra.mxu0 0.0
    %1081 = vmatprep.subr.mxu0 0.0
    %1082 = vmatpush1.msra.mxu0 0.0
    %1083 = vmatprep.subr.mxu0 0.0
    %1084 = vmatpush1.msra.mxu0 0.0
    %1085 = vmatprep.subr.mxu0 0.0
    %1086 = vmatpush1.msra.mxu0 0.0
    %1087 = vmatprep.subr.mxu0 0.0
    %1088 = vmatpush1.msra.mxu0 0.0
    %1089 = vmatprep.subr.mxu0 0.0
    %1090 = vmatpush1.msra.mxu0 0.0
    %1091 = vmatprep.subr.mxu0 0.0
    %1092 = vmatpush1.msra.mxu0 0.0
    %1093 = vmatprep.subr.mxu0 0.0
    %1094 = vmatpush1.msra.mxu0 0.0
    %1095 = vmatprep.subr.mxu0 0.0
    %1096 = vmatpush1.msra.mxu0 0.0
    %1097 = vmatprep.mubr.f32.mxu0 0.0
    %1098 = vmatmul.mubr.f32.gmra.mrb[0].mxu0 %v1009
    %v1099 = vpop.f32.mrb[0].mxu0
    %v1100 = vadd.f32 %v1031, %v1099
    %v1101 = vpop.f32.mrb[0].mxu0
    %1102 = vdwg.mxu0
    %vm1103 = vcmask 1024
    %1104 = vst.msk [vmem:[%s16] sm:$0x3] %vm1103, %v1100
    // Predicated region
    $region74: #{critic_forward.1} parent=1 // pred_check
      _
    $region75: #{critic_forward.1} parent=1 // pred_check_branch
      %1106 = sbr.rel (0) target = $region77
    $region76: #{critic_forward.1} parent=1 // pred_region
      _
    $region77: #{critic_forward.1} parent=1 // pred_fallthru
      _
    // Predicated region
    $region78: #{critic_forward.1} parent=1 // pred_check
      _
    $region79: #{critic_forward.1} parent=1 // pred_check_branch
      %1108 = sbr.rel (0) target = $region81
    $region80: #{critic_forward.1} parent=1 // pred_region
      _
    $region81: #{critic_forward.1} parent=1 // pred_fallthru
      _
    %1109 = vsyncpa [#allocation4], 1
    %1110 = vsyncpa [#allocation6], 1

</llo_original>
